<compile_context>
chip_gen: v6e
topology: v6e:2x2x1
jax: 0.10.0
libtpu: 0.0.40
codegen_flags: <defaults>
</compile_context>

<pallas_src>
import jax
import jax.numpy as jnp
import numpy as np
from jax.experimental import pallas as pl
from jax.experimental.pallas import tpu as pltpu

K = 4        # kernel_size
STRIDE = 2
PAD = 1
EPS = 1e-5   # BatchNorm2d default eps

LANE = 128
_VMEM_LIMIT = 48 << 20        # under v7x's 64 MiB physical VMEM, above default scoped limits
_VMEM_TILE_BUDGET = 24 << 20  # budget for double-buffered blocks when picking tile_m


def _round_up(x, m):
    return (x + m - 1) // m * m


# ---------------- Pallas kernels ----------------

def _matmul_stats_kernel(p_ref, w_ref, y_ref, stats_ref):
    """y = patches_tile @ W_phase (bf16 in, f32 accumulate). Also emit per-tile partial
    channel sum (row 0) and sum-of-squares (row 1) for BatchNorm batch statistics."""
    y = jnp.dot(p_ref[...], w_ref[...], preferred_element_type=jnp.float32)
    y_ref[...] = y.astype(y_ref.dtype)
    s = jnp.sum(y, axis=0, keepdims=True)        # (1, Cp)
    sq = jnp.sum(y * y, axis=0, keepdims=True)   # (1, Cp)
    row = jax.lax.broadcasted_iota(jnp.int32, stats_ref.shape, 0)
    stats_ref[...] = jnp.where(row == 0, s, 0.0) + jnp.where(row == 1, sq, 0.0)


def _bn_relu_kernel(y_ref, scale_ref, shift_ref, o_ref):
    """Fused BatchNorm affine (precomputed per-channel scale/shift) + ReLU."""
    y = y_ref[...].astype(jnp.float32)
    o_ref[...] = jnp.maximum(y * scale_ref[...] + shift_ref[...], 0.0)


# ---------------- JAX glue: sub-pixel decomposition ----------------

# ConvTranspose2d(k=4, s=2, p=1): output row oy = 2*m + py reads a fixed 2-tap input
# window. With a 1-pixel zero border, tap dy in {0,1} reads padded row (m + py + dy) and
# uses kernel row kh = _PHASE_KH[py][dy]. Columns are identical with px/kw.
_PHASE_KH = ((3, 1), (2, 0))


def _phase_patches_and_weights(x, weight):
    """Per output phase: patches [N*H*W, Cin*4] and weight matrix [Cin*4, Cout]."""
    N, Cin, H, W_ = x.shape
    x_nhwc = jnp.transpose(x, (0, 2, 3, 1))                    # [N, H, W, Cin]
    x_pad = jnp.pad(x_nhwc, ((0, 0), (1, 1), (1, 1), (0, 0)))  # [N, H+2, W+2, Cin]

    patch_list, w_list = [], []
    for py in range(2):
        for px in range(2):
            taps, wrows = [], []
            for dy in range(2):
                for dx in range(2):
                    ry, rx = py + dy, px + dx
                    taps.append(x_pad[:, ry:ry + H, rx:rx + W_, :])   # [N, H, W, Cin]
                    kh, kw = _PHASE_KH[py][dy], _PHASE_KH[px][dx]
                    wrows.append(weight[:, :, kh, kw])                # [Cin, Cout]
            patch_list.append(
                jnp.concatenate(taps, axis=-1).reshape(N * H * W_, 4 * Cin))
            w_list.append(jnp.concatenate(wrows, axis=0))             # [4*Cin, Cout]
    return jnp.stack(patch_list, 0), jnp.stack(w_list, 0)  # [4,M,4Cin], [4,4Cin,Cout]


# ---------------- wrapper ----------------

def upconv_block(x, weight, bias, gamma, beta, *, tile_m_max=1024):
    """ConvTranspose2d(k=4,s=2,p=1) -> BatchNorm2d(batch stats) -> ReLU.

    x: [N, Cin, H, W]; weight: [Cin, Cout, 4, 4] (PyTorch ConvTranspose2d layout);
    bias/gamma/beta: [Cout]. Returns [N, Cout, 2H, 2W] float32.
    `bias` is accepted for API parity but is a mathematical no-op: a per-channel
    constant is exactly cancelled by training-mode BatchNorm.
    """
    del bias
    N, Cin, H, W_ = x.shape
    Cout = weight.shape[1]
    Ho, Wo = 2 * H, 2 * W_

    patches, wmats = _phase_patches_and_weights(x, weight)
    M_in = N * H * W_
    Kdim = 4 * Cin
    Cp = _round_up(Cout, LANE)

    # Tile sizing: biggest tile_m (<= tile_m_max) whose double-buffered blocks fit the
    # VMEM budget. M is padded to the tile boundary (the padded zero rows contribute
    # exactly zero to the batch statistics since the conv has no in-kernel bias).
    bytes_per_row = 2 * (Kdim * 2 + Cp * 2) + 2 * (Cp * 2 + Cp * 4)
    tile_m = min(tile_m_max, _round_up(M_in, 256))
    while tile_m > 256 and tile_m * bytes_per_row > _VMEM_TILE_BUDGET:
        tile_m //= 2
    M_pad = _round_up(M_in, tile_m)
    num_tiles = M_pad // tile_m

    patches_p = jnp.pad(patches.astype(jnp.bfloat16),
                        ((0, 0), (0, M_pad - M_in), (0, 0)))          # [4, M_pad, Kdim]
    wmats_p = jnp.pad(wmats.astype(jnp.bfloat16),
                      ((0, 0), (0, 0), (0, Cp - Cout)))               # [4, Kdim, Cp]

    y, stats = pl.pallas_call(
        _matmul_stats_kernel,
        grid=(4, num_tiles),
        in_specs=[
            pl.BlockSpec((None, tile_m, Kdim), lambda ph, i: (ph, i, 0)),
            pl.BlockSpec((None, Kdim, Cp), lambda ph, i: (ph, 0, 0)),
        ],
        out_specs=[
            pl.BlockSpec((None, tile_m, Cp), lambda ph, i: (ph, i, 0)),
            pl.BlockSpec((8, Cp), lambda ph, i: (ph * num_tiles + i, 0)),
        ],
        out_shape=[
            jax.ShapeDtypeStruct((4, M_pad, Cp), jnp.bfloat16),
            jax.ShapeDtypeStruct((4 * num_tiles * 8, Cp), jnp.float32),
        ],
        compiler_params=pltpu.CompilerParams(
            dimension_semantics=("parallel", "parallel"),
            vmem_limit_bytes=_VMEM_LIMIT),
    )(patches_p, wmats_p)

    # BatchNorm2d (training mode): biased batch stats over all N*Ho*Wo positions.
    st = stats.reshape(4 * num_tiles, 8, Cp)
    count = jnp.float32(4 * M_in)                                     # = N * Ho * Wo
    mean = jnp.sum(st[:, 0, :], axis=0) / count
    var = jnp.maximum(jnp.sum(st[:, 1, :], axis=0) / count - mean * mean, 0.0)
    gamma_p = jnp.pad(gamma.astype(jnp.float32), (0, Cp - Cout))
    beta_p = jnp.pad(beta.astype(jnp.float32), (0, Cp - Cout))
    scale_v = gamma_p * jax.lax.rsqrt(var + EPS)
    scale = scale_v.reshape(1, Cp)
    shift = (beta_p - mean * scale_v).reshape(1, Cp)

    rows = 4 * M_pad
    out = pl.pallas_call(
        _bn_relu_kernel,
        grid=(rows // tile_m,),
        in_specs=[
            pl.BlockSpec((tile_m, Cp), lambda i: (i, 0)),
            pl.BlockSpec((1, Cp), lambda i: (0, 0)),
            pl.BlockSpec((1, Cp), lambda i: (0, 0)),
        ],
        out_specs=pl.BlockSpec((tile_m, Cp), lambda i: (i, 0)),
        out_shape=jax.ShapeDtypeStruct((rows, Cp), jnp.float32),
        compiler_params=pltpu.CompilerParams(
            dimension_semantics=("parallel",),
            vmem_limit_bytes=_VMEM_LIMIT),
    )(y.reshape(rows, Cp), scale, shift)

    # Re-interleave the 4 sub-pixel phases and return NCHW to match PyTorch.
    out = out.reshape(4, M_pad, Cp)[:, :M_in, :Cout]                  # [4, N*H*W, Cout]
    out = out.reshape(2, 2, N, H, W_, Cout)                           # [py,px,n,m,p,co]
    out = out.transpose(2, 5, 3, 0, 4, 1)                             # [n,co,m,py,p,px]
    return out.reshape(N, Cout, Ho, Wo)


# ---------------- pure-JAX reference (scatter form of ConvTranspose2d, with bias) ----------------

def ref_upconv_block(x, weight, bias, gamma, beta):
    N, Cin, H, W_ = x.shape
    Cout = weight.shape[1]
    t = jnp.einsum('ncij,cokl->noijkl', x, weight,
                   precision=jax.lax.Precision.HIGHEST)
    out_full = jnp.zeros((N, Cout, (H - 1) * STRIDE + K, (W_ - 1) * STRIDE + K),
                         jnp.float32)
    for kh in range(K):
        for kw in range(K):
            out_full = out_full.at[:, :,
                                   kh:kh + (H - 1) * STRIDE + 1:STRIDE,
                                   kw:kw + (W_ - 1) * STRIDE + 1:STRIDE].add(t[..., kh, kw])
    y = out_full[:, :, PAD:-PAD, PAD:-PAD] + bias[None, :, None, None]
    mean = y.mean(axis=(0, 2, 3), keepdims=True)
    var = y.var(axis=(0, 2, 3), keepdims=True)
    yn = (y - mean) / jnp.sqrt(var + EPS)
    return jnp.maximum(yn * gamma[None, :, None, None] + beta[None, :, None, None], 0.0)


if __name__ == "__main__":
    key = jax.random.PRNGKey(0)
    N, Cin, Cout, H, W_ = 2, 4, 8, 16, 16
    kx, kw_, kb, kg, kbt = jax.random.split(key, 5)
    x = jax.random.normal(kx, (N, Cin, H, W_), jnp.float32)
    # ConvTranspose2d weight layout: [in_channels, out_channels, kH, kW]
    weight = 0.1 * jax.random.normal(kw_, (Cin, Cout, K, K), jnp.float32)
    bias = 0.1 * jax.random.normal(kb, (Cout,), jnp.float32)
    gamma = 1.0 + 0.1 * jax.random.normal(kg, (Cout,), jnp.float32)
    beta = 0.1 * jax.random.normal(kbt, (Cout,), jnp.float32)

    out = jax.block_until_ready(jax.jit(upconv_block)(x, weight, bias, gamma, beta))
    ref = jax.block_until_ready(ref_upconv_block(x, weight, bias, gamma, beta))
    np.testing.assert_allclose(np.asarray(out), np.asarray(ref), rtol=2e-2, atol=2e-2)
    print("KERNEL_OK")
</pallas_src>

<mosaic_0001>
module attributes {stable_mosaic.version = 11 : i64} {
  func.func @_matmul_stats_kernel(%arg0: i32, %arg1: i32, %arg2: memref<1x512x16xbf16, #tpu.memory_space<vmem>>, %arg3: memref<1x16x128xbf16, #tpu.memory_space<vmem>>, %arg4: memref<1x512x128xbf16, #tpu.memory_space<vmem>>, %arg5: memref<8x128xf32, #tpu.memory_space<vmem>>) attributes {dimension_semantics = [#tpu.dimension_semantics<parallel>, #tpu.dimension_semantics<parallel>], iteration_bounds = array<i64: 4, 1>, scalar_prefetch = 0 : i64, scratch_operands = 0 : i64, tpu.core_type = #tpu.core_type<tc>, window_params = [{transform_indices = @transform_0, window_bounds = array<i64: 1, 512, 16>}, {transform_indices = @transform_1, window_bounds = array<i64: 1, 16, 128>}, {transform_indices = @transform_2, window_bounds = array<i64: 1, 512, 128>}, {transform_indices = @transform_3, window_bounds = array<i64: 8, 128>}]} {
    %c0 = arith.constant 0 : index
    %c0_0 = arith.constant 0 : index
    %c0_1 = arith.constant 0 : index
    %0 = vector.load %arg2[%c0, %c0_0, %c0_1] : memref<1x512x16xbf16, #tpu.memory_space<vmem>>, vector<1x512x16xbf16>
    %1 = vector.shape_cast %0 : vector<1x512x16xbf16> to vector<512x16xbf16>
    %c0_2 = arith.constant 0 : index
    %c0_3 = arith.constant 0 : index
    %c0_4 = arith.constant 0 : index
    %2 = vector.load %arg3[%c0_2, %c0_3, %c0_4] : memref<1x16x128xbf16, #tpu.memory_space<vmem>>, vector<1x16x128xbf16>
    %3 = vector.shape_cast %2 : vector<1x16x128xbf16> to vector<16x128xbf16>
    %cst = arith.constant dense<0.000000e+00> : vector<512x128xf32>
    %4 = tpu.matmul %1, %3, %cst {dimension_numbers = #tpu.dot_dimension_numbers<[1], [0], [0], [1], [0, 0, 1, 1], [], []>} : vector<512x16xbf16>, vector<16x128xbf16>, vector<512x128xf32> -> vector<512x128xf32>
    %5 = arith.truncf %4 : vector<512x128xf32> to vector<512x128xbf16>
    %c0_5 = arith.constant 0 : index
    %c0_6 = arith.constant 0 : index
    %c0_7 = arith.constant 0 : index
    %6 = vector.load %arg4[%c0_5, %c0_6, %c0_7] : memref<1x512x128xbf16, #tpu.memory_space<vmem>>, vector<1x512x128xbf16>
    %7 = vector.shape_cast %6 : vector<1x512x128xbf16> to vector<512x128xbf16>
    %8 = vector.shape_cast %5 : vector<512x128xbf16> to vector<1x512x128xbf16>
    tpu.vector_store %arg4[%c0_5, %c0_6, %c0_7], %8 {strides = array<i32>} : memref<1x512x128xbf16, #tpu.memory_space<vmem>>, vector<1x512x128xbf16>,
    %cst_8 = arith.constant dense<0.000000e+00> : vector<128xf32>
    %9 = vector.multi_reduction <add>, %4, %cst_8 [0] : vector<512x128xf32> to vector<128xf32>
    %10 = vector.shape_cast %9 : vector<128xf32> to vector<1x128xf32>
    %11 = arith.mulf %4, %4 : vector<512x128xf32>
    %cst_9 = arith.constant dense<0.000000e+00> : vector<128xf32>
    %12 = vector.multi_reduction <add>, %11, %cst_9 [0] : vector<512x128xf32> to vector<128xf32>
    %13 = vector.shape_cast %12 : vector<128xf32> to vector<1x128xf32>
    %14 = tpu.iota {dimensions = array<i32: 0>} : vector<8x128xi32>
    %c0_i32 = arith.constant 0 : i32
    %15 = vector.broadcast %c0_i32 : i32 to vector<8x128xi32>
    %16 = arith.cmpi eq, %14, %15 : vector<8x128xi32>
    %cst_10 = arith.constant 0.000000e+00 : f32
    %17 = vector.shape_cast %10 : vector<1x128xf32> to vector<1x128xf32>
    %18 = vector.broadcast %17 : vector<1x128xf32> to vector<8x128xf32>
    %19 = vector.broadcast %cst_10 : f32 to vector<8x128xf32>
    %20 = arith.select %16, %18, %19 : vector<8x128xi1>, vector<8x128xf32>
    %c1_i32 = arith.constant 1 : i32
    %21 = vector.broadcast %c1_i32 : i32 to vector<8x128xi32>
    %22 = arith.cmpi eq, %14, %21 : vector<8x128xi32>
    %cst_11 = arith.constant 0.000000e+00 : f32
    %23 = vector.shape_cast %13 : vector<1x128xf32> to vector<1x128xf32>
    %24 = vector.broadcast %23 : vector<1x128xf32> to vector<8x128xf32>
    %25 = vector.broadcast %cst_11 : f32 to vector<8x128xf32>
    %26 = arith.select %22, %24, %25 : vector<8x128xi1>, vector<8x128xf32>
    %27 = arith.addf %20, %26 : vector<8x128xf32>
    %c0_12 = arith.constant 0 : index
    %c0_13 = arith.constant 0 : index
    %28 = vector.load %arg5[%c0_12, %c0_13] : memref<8x128xf32, #tpu.memory_space<vmem>>, vector<8x128xf32>
    tpu.vector_store %arg5[%c0_12, %c0_13], %27 {strides = array<i32>} : memref<8x128xf32, #tpu.memory_space<vmem>>, vector<8x128xf32>,
    return
  }
  func.func @transform_0(%arg0: i32, %arg1: i32) -> (i32, i32, i32) {
    %c0_i32 = arith.constant 0 : i32
    %c0_i32_0 = arith.constant 0 : i32
    return %arg0, %arg1, %c0_i32 : i32, i32, i32
  }
  func.func @transform_1(%arg0: i32, %arg1: i32) -> (i32, i32, i32) {
    %c0_i32 = arith.constant 0 : i32
    %c0_i32_0 = arith.constant 0 : i32
    %c0_i32_1 = arith.constant 0 : i32
    return %arg0, %c0_i32, %c0_i32_0 : i32, i32, i32
  }
  func.func @transform_2(%arg0: i32, %arg1: i32) -> (i32, i32, i32) {
    %c0_i32 = arith.constant 0 : i32
    %c0_i32_0 = arith.constant 0 : i32
    return %arg0, %arg1, %c0_i32 : i32, i32, i32
  }
  func.func @transform_3(%arg0: i32, %arg1: i32) -> (i32, i32) {
    %c1_i32 = arith.constant 1 : i32
    %0 = arith.muli %arg0, %c1_i32 : i32
    %1 = arith.addi %0, %arg1 : i32
    %c0_i32 = arith.constant 0 : i32
    %c0_i32_0 = arith.constant 0 : i32
    return %1, %c0_i32 : i32, i32
  }
}

module attributes {stable_mosaic.version = 11 : i64} {
  func.func @_bn_relu_kernel(%arg0: i32, %arg1: memref<512x128xbf16, #tpu.memory_space<vmem>>, %arg2: memref<1x128xf32, #tpu.memory_space<vmem>>, %arg3: memref<1x128xf32, #tpu.memory_space<vmem>>, %arg4: memref<512x128xf32, #tpu.memory_space<vmem>>) attributes {dimension_semantics = [#tpu.dimension_semantics<parallel>], iteration_bounds = array<i64: 4>, scalar_prefetch = 0 : i64, scratch_operands = 0 : i64, tpu.core_type = #tpu.core_type<tc>, window_params = [{transform_indices = @transform_0, window_bounds = array<i64: 512, 128>}, {pipeline_mode = #tpu.pipeline_mode<synchronous>, transform_indices = @transform_1, window_bounds = array<i64: 1, 128>}, {pipeline_mode = #tpu.pipeline_mode<synchronous>, transform_indices = @transform_2, window_bounds = array<i64: 1, 128>}, {transform_indices = @transform_3, window_bounds = array<i64: 512, 128>}]} {
    %c0 = arith.constant 0 : index
    %c0_0 = arith.constant 0 : index
    %0 = vector.load %arg1[%c0, %c0_0] : memref<512x128xbf16, #tpu.memory_space<vmem>>, vector<512x128xbf16>
    %1 = arith.extf %0 : vector<512x128xbf16> to vector<512x128xf32>
    %c0_1 = arith.constant 0 : index
    %c0_2 = arith.constant 0 : index
    %2 = vector.load %arg2[%c0_1, %c0_2] : memref<1x128xf32, #tpu.memory_space<vmem>>, vector<1x128xf32>
    %3 = vector.broadcast %2 : vector<1x128xf32> to vector<512x128xf32>
    %4 = arith.mulf %1, %3 : vector<512x128xf32>
    %c0_3 = arith.constant 0 : index
    %c0_4 = arith.constant 0 : index
    %5 = vector.load %arg3[%c0_3, %c0_4] : memref<1x128xf32, #tpu.memory_space<vmem>>, vector<1x128xf32>
    %6 = vector.broadcast %5 : vector<1x128xf32> to vector<512x128xf32>
    %7 = arith.addf %4, %6 : vector<512x128xf32>
    %cst = arith.constant 0.000000e+00 : f32
    %8 = vector.broadcast %cst : f32 to vector<512x128xf32>
    %9 = arith.maximumf %7, %8 : vector<512x128xf32>
    %c0_5 = arith.constant 0 : index
    %c0_6 = arith.constant 0 : index
    %10 = vector.load %arg4[%c0_5, %c0_6] : memref<512x128xf32, #tpu.memory_space<vmem>>, vector<512x128xf32>
    tpu.vector_store %arg4[%c0_5, %c0_6], %9 {strides = array<i32>} : memref<512x128xf32, #tpu.memory_space<vmem>>, vector<512x128xf32>,
    return
  }
  func.func @transform_0(%arg0: i32) -> (i32, i32) {
    %c0_i32 = arith.constant 0 : i32
    %c0_i32_0 = arith.constant 0 : i32
    return %arg0, %c0_i32 : i32, i32
  }
  func.func @transform_1(%arg0: i32) -> (i32, i32) {
    %c0_i32 = arith.constant 0 : i32
    %c0_i32_0 = arith.constant 0 : i32
    %c0_i32_1 = arith.constant 0 : i32
    return %c0_i32, %c0_i32_0 : i32, i32
  }
  func.func @transform_2(%arg0: i32) -> (i32, i32) {
    %c0_i32 = arith.constant 0 : i32
    %c0_i32_0 = arith.constant 0 : i32
    %c0_i32_1 = arith.constant 0 : i32
    return %c0_i32, %c0_i32_0 : i32, i32
  }
  func.func @transform_3(%arg0: i32) -> (i32, i32) {
    %c0_i32 = arith.constant 0 : i32
    %c0_i32_0 = arith.constant 0 : i32
    return %arg0, %c0_i32 : i32, i32
  }
}

</mosaic_0001>

<llo_original>
// kernel: upconv_block.2
$region0: #{upconv_block.2}
  #allocation0 [shape = 'u32[]', space=smem, size = 0x4, offset = 0x4, fixed_abs, tag = 'smem constant byte address 0x4 - core index']
  #allocation1 [shape = 'u32[144,128]{1,0:T(1,128)}', space=vmem, size = 0x12000, scoped, tag = 'internal scratch']
  %s0 = inlined_call_operand.vmem [shape: bf16[4,512,16], index: 0, kind: input, shape index: {}]
  %s1 = inlined_call_operand.vmem [shape: bf16[4,16,128], index: 1, kind: input, shape index: {}]
  %s2 = inlined_call_operand.vmem [shape: bf16[4,512,128], index: 2, kind: output, shape index: {0}]
  %s3 = inlined_call_operand.vmem [shape: f32[32,128], index: 3, kind: output, shape index: {1}]
  %4 = xla_tuple %s2, %s3
  %s5 = sld [smem:[#allocation0]]
  $region49: #{upconv_block.2} parent=0
    _
  %s7 = ssub.s32 1, %s5
  %s8 = scalar_select 0, %s7, %s5
  loop: start=0, step=1, limit=6
  $region2: #{upconv_block.2} parent=0 // loop_pre_header
    _
  $region3: #{upconv_block.2} parent=0 // loop_header
    %s10 = sphi 0, %s14
    %p11 = scmp.ge.s32.totalorder %s10, 6
    %s17 = sphi 0, %s29
    %s18 = sphi 0, %s25
    %s19 = sphi 0, %s17
    %s20 = sphi 0, %s18
    %s21 = sphi 0, %s19
    %s22 = sphi 0, %s20
    %s34 = sphi 0, %s36
    %s37 = sphi 0, %s34
    %s38 = sphi 0, %s37
    %s54 = sphi 0, %s38
    %s60 = sphi 0, %s62
    %s63 = sphi 0, %s60
    %s64 = sphi 0, %s63
    %s80 = sphi 0, %s64
    %s88 = sphi 0, %s90
    %s91 = sphi 0, %s88
    %s92 = sphi 0, %s91
    %s108 = sphi 0, %s92
    %s116 = sphi 0, %s118
    %s119 = sphi 0, %s116
    %s120 = sphi 0, %s119
    %s136 = sphi 0, %s120
  $region4: #{upconv_block.2} parent=0 // loop_header_branch
    %13 = sbr.rel (%p11) target = $region8
  $region5: #{upconv_block.2} parent=0 // loop_body
    %s15 = ssub.s32 %s10, 1
    %s16 = ssub.s32 %s10, 2
    %s23 = sadd.s32 1, %s18
    %p24 = scmp.ge.s32.totalorder %s23, 1
    %s25 = scalar_select %p24, 0, %s23
    %s26 = sadd.s32 1, %s17
    %s27 = scalar_select %p24, %s26, %s17
    %p28 = scmp.ge.s32.totalorder %s27, 4
    %s29 = scalar_select %p28, 0, %s27
    %s30 = ssub.s32 %s17, %s29
    %s31 = ssub.s32 %s18, %s25
    %s32 = sor.u32 %s30, %s31
    %p33 = scmp.eq.s32.totalorder %s32, 0
    %s35 = sadd.s32 %s34, 1
    %s36 = scalar_select %p33, %s34, %s35
    %p39 = pneg %p33
    %p40 = scmp.eq.s32.totalorder %s10, 3
    %p41 = por %p39, %p40
    %p42 = scmp.ne.s32.totalorder %s34, %s37
    %p43 = scmp.eq.s32.totalorder %s10, 0
    %p44 = por %p42, %p43
    %p45 = scmp.ne.s32.totalorder %s34, %s37
    %p46 = scmp.eq.s32.totalorder %s15, 3
    %p47 = por %p45, %p46
    %p48 = scmp.ne.s32.totalorder %s37, %s38
    %p49 = scmp.eq.s32.totalorder %s15, 0
    %p50 = por %p48, %p49
    %p51 = scmp.ne.s32.totalorder %s37, %s38
    %p52 = scmp.eq.s32.totalorder %s16, 3
    %p53 = por %p51, %p52
    %p55 = scmp.ne.s32.totalorder %s38, %s54
    %p56 = scmp.eq.s32.totalorder %s16, 0
    %p57 = por %p55, %p56
    %s58 = ssub.s32 %s17, %s29
    %p59 = scmp.eq.s32.totalorder %s58, 0
    %s61 = sadd.s32 %s60, 1
    %s62 = scalar_select %p59, %s60, %s61
    %p65 = pneg %p59
    %p66 = scmp.eq.s32.totalorder %s10, 3
    %p67 = por %p65, %p66
    %p68 = scmp.ne.s32.totalorder %s60, %s63
    %p69 = scmp.eq.s32.totalorder %s10, 0
    %p70 = por %p68, %p69
    %p71 = scmp.ne.s32.totalorder %s60, %s63
    %p72 = scmp.eq.s32.totalorder %s15, 3
    %p73 = por %p71, %p72
    %p74 = scmp.ne.s32.totalorder %s63, %s64
    %p75 = scmp.eq.s32.totalorder %s15, 0
    %p76 = por %p74, %p75
    %p77 = scmp.ne.s32.totalorder %s63, %s64
    %p78 = scmp.eq.s32.totalorder %s16, 3
    %p79 = por %p77, %p78
    %p81 = scmp.ne.s32.totalorder %s64, %s80
    %p82 = scmp.eq.s32.totalorder %s16, 0
    %p83 = por %p81, %p82
    %s84 = ssub.s32 %s17, %s29
    %s85 = ssub.s32 %s18, %s25
    %s86 = sor.u32 %s84, %s85
    %p87 = scmp.eq.s32.totalorder %s86, 0
    %s89 = sadd.s32 %s88, 1
    %s90 = scalar_select %p87, %s88, %s89
    %p93 = pneg %p87
    %p94 = scmp.eq.s32.totalorder %s10, 3
    %p95 = por %p93, %p94
    %p96 = scmp.ne.s32.totalorder %s88, %s91
    %p97 = scmp.eq.s32.totalorder %s10, 0
    %p98 = por %p96, %p97
    %p99 = scmp.ne.s32.totalorder %s88, %s91
    %p100 = scmp.eq.s32.totalorder %s15, 3
    %p101 = por %p99, %p100
    %p102 = scmp.ne.s32.totalorder %s91, %s92
    %p103 = scmp.eq.s32.totalorder %s15, 0
    %p104 = por %p102, %p103
    %p105 = scmp.ne.s32.totalorder %s91, %s92
    %p106 = scmp.eq.s32.totalorder %s16, 3
    %p107 = por %p105, %p106
    %p109 = scmp.ne.s32.totalorder %s92, %s108
    %p110 = scmp.eq.s32.totalorder %s16, 0
    %p111 = por %p109, %p110
    %s112 = sadd.s32 %s17, %s18
    %s113 = sadd.s32 %s29, %s25
    %s114 = ssub.s32 %s112, %s113
    %p115 = scmp.eq.s32.totalorder %s114, 0
    %s117 = sadd.s32 %s116, 1
    %s118 = scalar_select %p115, %s116, %s117
    %p121 = pneg %p115
    %p122 = scmp.eq.s32.totalorder %s10, 3
    %p123 = por %p121, %p122
    %p124 = scmp.ne.s32.totalorder %s116, %s119
    %p125 = scmp.eq.s32.totalorder %s10, 0
    %p126 = por %p124, %p125
    %p127 = scmp.ne.s32.totalorder %s116, %s119
    %p128 = scmp.eq.s32.totalorder %s15, 3
    %p129 = por %p127, %p128
    %p130 = scmp.ne.s32.totalorder %s119, %s120
    %p131 = scmp.eq.s32.totalorder %s15, 0
    %p132 = por %p130, %p131
    %p133 = scmp.ne.s32.totalorder %s119, %s120
    %p134 = scmp.eq.s32.totalorder %s16, 3
    %p135 = por %p133, %p134
    %p137 = scmp.ne.s32.totalorder %s120, %s136
    %p138 = scmp.eq.s32.totalorder %s16, 0
    %p139 = por %p137, %p138
    %p140 = scmp.le.s32.totalorder 1, %s10
    %p141 = scmp.lt.s32.totalorder %s10, 5
    %p142 = pnand %p140, %p141
    %p143 = pneg %p142
    // Predicated region
    $region9: #{upconv_block.2} parent=5 // pred_check
      _
    $region10: #{upconv_block.2} parent=5 // pred_check_branch
      %145 = sbr.rel (%p142) target = $region12
    $region11: #{upconv_block.2} parent=5 // pred_region
      %s146 = ssub.s32 %s10, 1
    $region12: #{upconv_block.2} parent=5 // pred_fallthru
      _
    %p147 = scmp.lt.s32.totalorder %s10, 4
    // Predicated region
    $region13: #{upconv_block.2} parent=5 // pred_check
      %p148 = pneg %p147
    $region14: #{upconv_block.2} parent=5 // pred_check_branch
      %150 = sbr.rel (%p148) target = $region16
    $region15: #{upconv_block.2} parent=5 // pred_region
      // Predicated region
      $region17: #{upconv_block.2} parent=15 // pred_check
        %p151 = pneg %p44
      $region18: #{upconv_block.2} parent=15 // pred_check_branch
        %153 = sbr.rel (%p151) target = $region20
      $region19: #{upconv_block.2} parent=15 // pred_region
        %s154 = smul.u32 64, %s18
        %p155 = scmp.lt.s32.totalorder %s17, 3
        %s156 = scalar_select %p155, %s17, 3
        %p157 = scmp.lt.s32.totalorder %s154, 63
        %s158 = scalar_select %p157, %s154, 63
        %s159 = smul.addr %s156, 64
        %s160 = sadd.s32 %s158, %s159
        %s161 = smul.addr %s160, 4
        %s162 = scalar_lea.vmem %s0, %s161
        %s163 = smul.u32 64, %s18
      $region20: #{upconv_block.2} parent=15 // pred_fallthru
        _
      // Predicated region
      $region21: #{upconv_block.2} parent=15 // pred_check
        %p164 = pneg %p70
      $region22: #{upconv_block.2} parent=15 // pred_check_branch
        %166 = sbr.rel (%p164) target = $region24
      $region23: #{upconv_block.2} parent=15 // pred_region
        %p167 = scmp.lt.s32.totalorder %s17, 3
        %s168 = scalar_select %p167, %s17, 3
        %s169 = smul.addr %s168, 2
        %s170 = smul.addr %s169, 4
        %s171 = scalar_lea.vmem %s1, %s170
      $region24: #{upconv_block.2} parent=15 // pred_fallthru
        _
    $region16: #{upconv_block.2} parent=5 // pred_fallthru
      _
    %p172 = scmp.le.s32.totalorder 1, %s10
    %p173 = scmp.lt.s32.totalorder %s10, 5
    %p174 = pnand %p172, %p173
    %p175 = pneg %p174
    // Predicated region
    $region25: #{upconv_block.2} parent=5 // pred_check
      _
    $region26: #{upconv_block.2} parent=5 // pred_check_branch
      %177 = sbr.rel (%p174) target = $region28
    $region27: #{upconv_block.2} parent=5 // pred_region
      %s178 = ssub.s32 %s10, 1
      %s179 = smul.u32 64, %s20
      %p180 = scmp.lt.s32.totalorder %s19, 3
      %s181 = scalar_select %p180, %s19, 3
      %p182 = scmp.lt.s32.totalorder %s179, 63
      %s183 = scalar_select %p182, %s179, 63
      %s184 = smul.addr %s181, 64
      %s185 = sadd.s32 %s183, %s184
      %s186 = smul.addr %s185, 4
      %s187 = scalar_lea.vmem %s0, %s186
      %p188 = pneg %p50
      %p189 = pneg %p47
      %p190 = scmp.lt.s32.totalorder %s19, 3
      %s191 = scalar_select %p190, %s19, 3
      %s192 = smul.addr %s191, 2
      %s193 = smul.addr %s192, 4
      %s194 = scalar_lea.vmem %s1, %s193
      %p195 = pneg %p76
      %p196 = pneg %p73
      %p197 = pneg %p104
      %p198 = pneg %p101
      %s199 = smul.u32 64, %s20
      %p200 = scmp.lt.s32.totalorder %s19, 3
      %s201 = scalar_select %p200, %s19, 3
      %p202 = scmp.lt.s32.totalorder %s199, 63
      %s203 = scalar_select %p202, %s199, 63
      %s204 = smul.addr %s201, 64
      %s205 = sadd.s32 %s203, %s204
      %s206 = smul.addr %s205, 4
      %s207 = scalar_lea.vmem %s2, %s206
      %p208 = pneg %p132
      %p209 = pneg %p129
      %s210 = sadd.s32 %s19, %s20
      %p211 = scmp.lt.s32.totalorder %s210, 3
      %s212 = scalar_select %p211, %s210, 3
      %s213 = smul.addr %s212, 8
      %s214 = scalar_lea.vmem %s3, %s213
      %s215 = smul.u32 64, %s20
      %p216 = scmp.lt.s32.totalorder %s19, 3
      %s217 = scalar_select %p216, %s19, 3
      %p218 = scmp.lt.s32.totalorder %s215, 63
      %s219 = scalar_select %p218, %s215, 63
      %s220 = smul.addr %s217, 64
      %s221 = sadd.s32 %s219, %s220
      %s222 = smul.addr %s221, 4
      %s223 = scalar_lea.vmem %s0, %s222
      %s224 = smul.u32 64, %s20
      %p225 = scmp.lt.s32.totalorder %s19, 3
      %s226 = scalar_select %p225, %s19, 3
      %s227 = smul.addr %s226, 2
      %s228 = smul.addr %s227, 4
      %s229 = scalar_lea.vmem %s1, %s228
      %s230 = smul.u32 64, %s20
      %p231 = scmp.lt.s32.totalorder %s19, 3
      %s232 = scalar_select %p231, %s19, 3
      %p233 = scmp.lt.s32.totalorder %s230, 63
      %s234 = scalar_select %p233, %s230, 63
      %s235 = smul.addr %s232, 64
      %s236 = sadd.s32 %s234, %s235
      %s237 = smul.addr %s236, 4
      %s238 = scalar_lea.vmem %s2, %s237
      %s239 = smul.u32 64, %s20
      %s240 = sadd.s32 %s19, %s20
      %p241 = scmp.lt.s32.totalorder %s240, 3
      %s242 = scalar_select %p241, %s240, 3
      %s243 = smul.addr %s242, 8
      %s244 = scalar_lea.vmem %s3, %s243
      %s245 = sadd.s32 %s19, %s20
      %v247 = vld [vmem:[%s223] sm:$0xf]
      %v248 = vld [vmem:[%s223 + $0x4] sm:$0xf]
      %v249 = vld [vmem:[%s223 + $0x8] sm:$0xf]
      %v250 = vld [vmem:[%s223 + $0xc] sm:$0xf]
      %v251 = vld [vmem:[%s223 + $0x10] sm:$0xf]
      %v252 = vld [vmem:[%s223 + $0x14] sm:$0xf]
      %v253 = vld [vmem:[%s223 + $0x18] sm:$0xf]
      %v254 = vld [vmem:[%s223 + $0x1c] sm:$0xf]
      %v255 = vld [vmem:[%s223 + $0x20] sm:$0xf]
      %v256 = vld [vmem:[%s223 + $0x24] sm:$0xf]
      %v257 = vld [vmem:[%s223 + $0x28] sm:$0xf]
      %v258 = vld [vmem:[%s223 + $0x2c] sm:$0xf]
      %v259 = vld [vmem:[%s223 + $0x30] sm:$0xf]
      %v260 = vld [vmem:[%s223 + $0x34] sm:$0xf]
      %v261 = vld [vmem:[%s223 + $0x38] sm:$0xf]
      %v262 = vld [vmem:[%s223 + $0x3c] sm:$0xf]
      %v263 = vld [vmem:[%s223 + $0x40] sm:$0xf]
      %v264 = vld [vmem:[%s223 + $0x44] sm:$0xf]
      %v265 = vld [vmem:[%s223 + $0x48] sm:$0xf]
      %v266 = vld [vmem:[%s223 + $0x4c] sm:$0xf]
      %v267 = vld [vmem:[%s223 + $0x50] sm:$0xf]
      %v268 = vld [vmem:[%s223 + $0x54] sm:$0xf]
      %v269 = vld [vmem:[%s223 + $0x58] sm:$0xf]
      %v270 = vld [vmem:[%s223 + $0x5c] sm:$0xf]
      %v271 = vld [vmem:[%s223 + $0x60] sm:$0xf]
      %v272 = vld [vmem:[%s223 + $0x64] sm:$0xf]
      %v273 = vld [vmem:[%s223 + $0x68] sm:$0xf]
      %v274 = vld [vmem:[%s223 + $0x6c] sm:$0xf]
      %v275 = vld [vmem:[%s223 + $0x70] sm:$0xf]
      %v276 = vld [vmem:[%s223 + $0x74] sm:$0xf]
      %v277 = vld [vmem:[%s223 + $0x78] sm:$0xf]
      %v278 = vld [vmem:[%s223 + $0x7c] sm:$0xf]
      %v279 = vld [vmem:[%s223 + $0x80] sm:$0xf]
      %v280 = vld [vmem:[%s223 + $0x84] sm:$0xf]
      %v281 = vld [vmem:[%s223 + $0x88] sm:$0xf]
      %v282 = vld [vmem:[%s223 + $0x8c] sm:$0xf]
      %v283 = vld [vmem:[%s223 + $0x90] sm:$0xf]
      %v284 = vld [vmem:[%s223 + $0x94] sm:$0xf]
      %v285 = vld [vmem:[%s223 + $0x98] sm:$0xf]
      %v286 = vld [vmem:[%s223 + $0x9c] sm:$0xf]
      %v287 = vld [vmem:[%s223 + $0xa0] sm:$0xf]
      %v288 = vld [vmem:[%s223 + $0xa4] sm:$0xf]
      %v289 = vld [vmem:[%s223 + $0xa8] sm:$0xf]
      %v290 = vld [vmem:[%s223 + $0xac] sm:$0xf]
      %v291 = vld [vmem:[%s223 + $0xb0] sm:$0xf]
      %v292 = vld [vmem:[%s223 + $0xb4] sm:$0xf]
      %v293 = vld [vmem:[%s223 + $0xb8] sm:$0xf]
      %v294 = vld [vmem:[%s223 + $0xbc] sm:$0xf]
      %v295 = vld [vmem:[%s223 + $0xc0] sm:$0xf]
      %v296 = vld [vmem:[%s223 + $0xc4] sm:$0xf]
      %v297 = vld [vmem:[%s223 + $0xc8] sm:$0xf]
      %v298 = vld [vmem:[%s223 + $0xcc] sm:$0xf]
      %v299 = vld [vmem:[%s223 + $0xd0] sm:$0xf]
      %v300 = vld [vmem:[%s223 + $0xd4] sm:$0xf]
      %v301 = vld [vmem:[%s223 + $0xd8] sm:$0xf]
      %v302 = vld [vmem:[%s223 + $0xdc] sm:$0xf]
      %v303 = vld [vmem:[%s223 + $0xe0] sm:$0xf]
      %v304 = vld [vmem:[%s223 + $0xe4] sm:$0xf]
      %v305 = vld [vmem:[%s223 + $0xe8] sm:$0xf]
      %v306 = vld [vmem:[%s223 + $0xec] sm:$0xf]
      %v307 = vld [vmem:[%s223 + $0xf0] sm:$0xf]
      %v308 = vld [vmem:[%s223 + $0xf4] sm:$0xf]
      %v309 = vld [vmem:[%s223 + $0xf8] sm:$0xf]
      %v310 = vld [vmem:[%s223 + $0xfc] sm:$0xf]
      %v311 = vld [vmem:[%s229] sm:$0xf]
      %v312 = vld [vmem:[%s229 + $0x4] sm:$0xf]
      %v377 = vunpack.c.l.b16 %v247
      %v378 = vunpack.c.l.b16 %v248
      %v379 = vunpack.c.l.b16 %v249
      %v380 = vunpack.c.l.b16 %v250
      %v381 = vunpack.c.l.b16 %v251
      %v382 = vunpack.c.l.b16 %v252
      %v383 = vunpack.c.l.b16 %v253
      %v384 = vunpack.c.l.b16 %v254
      %v385 = vunpack.c.l.b16 %v255
      %v386 = vunpack.c.l.b16 %v256
      %v387 = vunpack.c.l.b16 %v257
      %v388 = vunpack.c.l.b16 %v258
      %v389 = vunpack.c.l.b16 %v259
      %v390 = vunpack.c.l.b16 %v260
      %v391 = vunpack.c.l.b16 %v261
      %v392 = vunpack.c.l.b16 %v262
      %v393 = vunpack.c.l.b16 %v263
      %v394 = vunpack.c.l.b16 %v264
      %v395 = vunpack.c.l.b16 %v265
      %v396 = vunpack.c.l.b16 %v266
      %v397 = vunpack.c.l.b16 %v267
      %v398 = vunpack.c.l.b16 %v268
      %v399 = vunpack.c.l.b16 %v269
      %v400 = vunpack.c.l.b16 %v270
      %v401 = vunpack.c.l.b16 %v271
      %v402 = vunpack.c.l.b16 %v272
      %v403 = vunpack.c.l.b16 %v273
      %v404 = vunpack.c.l.b16 %v274
      %v405 = vunpack.c.l.b16 %v275
      %v406 = vunpack.c.l.b16 %v276
      %v407 = vunpack.c.l.b16 %v277
      %v408 = vunpack.c.l.b16 %v278
      %v409 = vunpack.c.l.b16 %v279
      %v410 = vunpack.c.l.b16 %v280
      %v411 = vunpack.c.l.b16 %v281
      %v412 = vunpack.c.l.b16 %v282
      %v413 = vunpack.c.l.b16 %v283
      %v414 = vunpack.c.l.b16 %v284
      %v415 = vunpack.c.l.b16 %v285
      %v416 = vunpack.c.l.b16 %v286
      %v417 = vunpack.c.l.b16 %v287
      %v418 = vunpack.c.l.b16 %v288
      %v419 = vunpack.c.l.b16 %v289
      %v420 = vunpack.c.l.b16 %v290
      %v421 = vunpack.c.l.b16 %v291
      %v422 = vunpack.c.l.b16 %v292
      %v423 = vunpack.c.l.b16 %v293
      %v424 = vunpack.c.l.b16 %v294
      %v425 = vunpack.c.l.b16 %v295
      %v426 = vunpack.c.l.b16 %v296
      %v427 = vunpack.c.l.b16 %v297
      %v428 = vunpack.c.l.b16 %v298
      %v429 = vunpack.c.l.b16 %v299
      %v430 = vunpack.c.l.b16 %v300
      %v431 = vunpack.c.l.b16 %v301
      %v432 = vunpack.c.l.b16 %v302
      %v433 = vunpack.c.l.b16 %v303
      %v434 = vunpack.c.l.b16 %v304
      %v435 = vunpack.c.l.b16 %v305
      %v436 = vunpack.c.l.b16 %v306
      %v437 = vunpack.c.l.b16 %v307
      %v438 = vunpack.c.l.b16 %v308
      %v439 = vunpack.c.l.b16 %v309
      %v440 = vunpack.c.l.b16 %v310
      %v441 = vpack.c.b16 %v378, %v377
      %v442 = vpack.c.b16 %v380, %v379
      %v443 = vpack.c.b16 %v382, %v381
      %v444 = vpack.c.b16 %v384, %v383
      %v445 = vpack.c.b16 %v386, %v385
      %v446 = vpack.c.b16 %v388, %v387
      %v447 = vpack.c.b16 %v390, %v389
      %v448 = vpack.c.b16 %v392, %v391
      %v449 = vpack.c.b16 %v394, %v393
      %v450 = vpack.c.b16 %v396, %v395
      %v451 = vpack.c.b16 %v398, %v397
      %v452 = vpack.c.b16 %v400, %v399
      %v453 = vpack.c.b16 %v402, %v401
      %v454 = vpack.c.b16 %v404, %v403
      %v455 = vpack.c.b16 %v406, %v405
      %v456 = vpack.c.b16 %v408, %v407
      %v457 = vpack.c.b16 %v410, %v409
      %v458 = vpack.c.b16 %v412, %v411
      %v459 = vpack.c.b16 %v414, %v413
      %v460 = vpack.c.b16 %v416, %v415
      %v461 = vpack.c.b16 %v418, %v417
      %v462 = vpack.c.b16 %v420, %v419
      %v463 = vpack.c.b16 %v422, %v421
      %v464 = vpack.c.b16 %v424, %v423
      %v465 = vpack.c.b16 %v426, %v425
      %v466 = vpack.c.b16 %v428, %v427
      %v467 = vpack.c.b16 %v430, %v429
      %v468 = vpack.c.b16 %v432, %v431
      %v469 = vpack.c.b16 %v434, %v433
      %v470 = vpack.c.b16 %v436, %v435
      %v471 = vpack.c.b16 %v438, %v437
      %v472 = vpack.c.b16 %v440, %v439
      %v475 = vunpack.c.l.b16 %v311
      %v476 = vunpack.c.l.b16 %v312
      %v477 = vpack.c.b16 %v476, %v475
      %vm479 = vcmask 130048
      %v481 = vsel %vm479, %v441, 0
      %v484 = vsel %vm479, %v442, 0
      %v487 = vsel %vm479, %v443, 0
      %v490 = vsel %vm479, %v444, 0
      %v493 = vsel %vm479, %v445, 0
      %v496 = vsel %vm479, %v446, 0
      %v499 = vsel %vm479, %v447, 0
      %v502 = vsel %vm479, %v448, 0
      %v505 = vsel %vm479, %v449, 0
      %v508 = vsel %vm479, %v450, 0
      %v511 = vsel %vm479, %v451, 0
      %v514 = vsel %vm479, %v452, 0
      %v517 = vsel %vm479, %v453, 0
      %v520 = vsel %vm479, %v454, 0
      %v523 = vsel %vm479, %v455, 0
      %v526 = vsel %vm479, %v456, 0
      %v529 = vsel %vm479, %v457, 0
      %v532 = vsel %vm479, %v458, 0
      %v535 = vsel %vm479, %v459, 0
      %v538 = vsel %vm479, %v460, 0
      %v541 = vsel %vm479, %v461, 0
      %v544 = vsel %vm479, %v462, 0
      %v547 = vsel %vm479, %v463, 0
      %v550 = vsel %vm479, %v464, 0
      %v553 = vsel %vm479, %v465, 0
      %v556 = vsel %vm479, %v466, 0
      %v559 = vsel %vm479, %v467, 0
      %v562 = vsel %vm479, %v468, 0
      %v565 = vsel %vm479, %v469, 0
      %v568 = vsel %vm479, %v470, 0
      %v571 = vsel %vm479, %v471, 0
      %v574 = vsel %vm479, %v472, 0
      %576 = vmatprep.subr.bf16.mxu0 0
      %577 = vmatpush1.bf16.msra.mxu0 0
      %578 = vmatprep.subr.bf16.mxu0 0
      %579 = vmatpush1.bf16.msra.mxu0 0
      %580 = vmatprep.subr.bf16.mxu0 0
      %581 = vmatpush1.bf16.msra.mxu0 0
      %582 = vmatprep.subr.bf16.mxu0 0
      %583 = vmatpush1.bf16.msra.mxu0 0
      %584 = vmatprep.subr.bf16.mxu0 0
      %585 = vmatpush1.bf16.msra.mxu0 0
      %586 = vmatprep.subr.bf16.mxu0 0
      %587 = vmatpush1.bf16.msra.mxu0 0
      %588 = vmatprep.subr.bf16.mxu0 0
      %589 = vmatpush1.bf16.msra.mxu0 0
      %590 = vmatprep.subr.bf16.mxu0 0
      %591 = vmatpush1.bf16.msra.mxu0 %v477
      %592 = vmatprep.subr.bf16.mxu0 0
      %593 = vmatpush2.bf16.msra.mxu0 0
      %594 = vmatprep.subr.bf16.mxu0 0
      %595 = vmatpush2.bf16.msra.mxu0 0
      %596 = vmatprep.subr.bf16.mxu0 0
      %597 = vmatpush2.bf16.msra.mxu0 0
      %598 = vmatprep.subr.bf16.mxu0 0
      %599 = vmatpush2.bf16.msra.mxu0 0
      %600 = vmatprep.subr.bf16.mxu0 0
      %601 = vmatpush2.bf16.msra.mxu0 0
      %602 = vmatprep.subr.bf16.mxu0 0
      %603 = vmatpush2.bf16.msra.mxu0 0
      %604 = vmatprep.subr.bf16.mxu0 0
      %605 = vmatpush2.bf16.msra.mxu0 0
      %606 = vmatprep.subr.bf16.mxu0 0
      %607 = vmatpush2.bf16.msra.mxu0 0
      %608 = vmatprep.mubr.bf16.mxu0 0
      %609 = vmatmul.mubr.bf16.gmra.mxu0 %v481
      %v610 = vpop.f32.mrf.mxu0
      %v611 = vadd.f32 0.0, %v610
      %v612 = vpop.f32.mrf.mxu0
      %v613 = vpop.f32.mrf.mxu0
      %v614 = vadd.f32 0.0, %v613
      %v615 = vpop.f32.mrf.mxu0
      %616 = vmatprep.mubr.bf16.mxu0 0
      %617 = vmatmul.mubr.bf16.gmra.mxu0 %v484
      %v618 = vpop.f32.mrf.mxu0
      %v619 = vadd.f32 0.0, %v618
      %v620 = vpop.f32.mrf.mxu0
      %v621 = vpop.f32.mrf.mxu0
      %v622 = vadd.f32 0.0, %v621
      %v623 = vpop.f32.mrf.mxu0
      %624 = vmatprep.mubr.bf16.mxu0 0
      %625 = vmatmul.mubr.bf16.gmra.mxu0 %v487
      %v626 = vpop.f32.mrf.mxu0
      %v627 = vadd.f32 0.0, %v626
      %v628 = vpop.f32.mrf.mxu0
      %v629 = vpop.f32.mrf.mxu0
      %v630 = vadd.f32 0.0, %v629
      %v631 = vpop.f32.mrf.mxu0
      %632 = vmatprep.mubr.bf16.mxu0 0
      %633 = vmatmul.mubr.bf16.gmra.mxu0 %v490
      %v634 = vpop.f32.mrf.mxu0
      %v635 = vadd.f32 0.0, %v634
      %v636 = vpop.f32.mrf.mxu0
      %v637 = vpop.f32.mrf.mxu0
      %v638 = vadd.f32 0.0, %v637
      %v639 = vpop.f32.mrf.mxu0
      %640 = vmatprep.mubr.bf16.mxu0 0
      %641 = vmatmul.mubr.bf16.gmra.mxu0 %v493
      %v642 = vpop.f32.mrf.mxu0
      %v643 = vadd.f32 0.0, %v642
      %v644 = vpop.f32.mrf.mxu0
      %v645 = vpop.f32.mrf.mxu0
      %v646 = vadd.f32 0.0, %v645
      %v647 = vpop.f32.mrf.mxu0
      %648 = vmatprep.mubr.bf16.mxu0 0
      %649 = vmatmul.mubr.bf16.gmra.mxu0 %v496
      %v650 = vpop.f32.mrf.mxu0
      %v651 = vadd.f32 0.0, %v650
      %v652 = vpop.f32.mrf.mxu0
      %v653 = vpop.f32.mrf.mxu0
      %v654 = vadd.f32 0.0, %v653
      %v655 = vpop.f32.mrf.mxu0
      %656 = vmatprep.mubr.bf16.mxu0 0
      %657 = vmatmul.mubr.bf16.gmra.mxu0 %v499
      %v658 = vpop.f32.mrf.mxu0
      %v659 = vadd.f32 0.0, %v658
      %v660 = vpop.f32.mrf.mxu0
      %v661 = vpop.f32.mrf.mxu0
      %v662 = vadd.f32 0.0, %v661
      %v663 = vpop.f32.mrf.mxu0
      %664 = vmatprep.mubr.bf16.mxu0 0
      %665 = vmatmul.mubr.bf16.gmra.mxu0 %v502
      %v666 = vpop.f32.mrf.mxu0
      %v667 = vadd.f32 0.0, %v666
      %v668 = vpop.f32.mrf.mxu0
      %v669 = vpop.f32.mrf.mxu0
      %v670 = vadd.f32 0.0, %v669
      %v671 = vpop.f32.mrf.mxu0
      %672 = vmatprep.mubr.bf16.mxu0 0
      %673 = vmatmul.mubr.bf16.gmra.mxu0 %v505
      %v674 = vpop.f32.mrf.mxu0
      %v675 = vadd.f32 0.0, %v674
      %v676 = vpop.f32.mrf.mxu0
      %v677 = vpop.f32.mrf.mxu0
      %v678 = vadd.f32 0.0, %v677
      %v679 = vpop.f32.mrf.mxu0
      %680 = vmatprep.mubr.bf16.mxu0 0
      %681 = vmatmul.mubr.bf16.gmra.mxu0 %v508
      %v682 = vpop.f32.mrf.mxu0
      %v683 = vadd.f32 0.0, %v682
      %v684 = vpop.f32.mrf.mxu0
      %v685 = vpop.f32.mrf.mxu0
      %v686 = vadd.f32 0.0, %v685
      %v687 = vpop.f32.mrf.mxu0
      %688 = vmatprep.mubr.bf16.mxu0 0
      %689 = vmatmul.mubr.bf16.gmra.mxu0 %v511
      %v690 = vpop.f32.mrf.mxu0
      %v691 = vadd.f32 0.0, %v690
      %v692 = vpop.f32.mrf.mxu0
      %v693 = vpop.f32.mrf.mxu0
      %v694 = vadd.f32 0.0, %v693
      %v695 = vpop.f32.mrf.mxu0
      %696 = vmatprep.mubr.bf16.mxu0 0
      %697 = vmatmul.mubr.bf16.gmra.mxu0 %v514
      %v698 = vpop.f32.mrf.mxu0
      %v699 = vadd.f32 0.0, %v698
      %v700 = vpop.f32.mrf.mxu0
      %v701 = vpop.f32.mrf.mxu0
      %v702 = vadd.f32 0.0, %v701
      %v703 = vpop.f32.mrf.mxu0
      %704 = vmatprep.mubr.bf16.mxu0 0
      %705 = vmatmul.mubr.bf16.gmra.mxu0 %v517
      %v706 = vpop.f32.mrf.mxu0
      %v707 = vadd.f32 0.0, %v706
      %v708 = vpop.f32.mrf.mxu0
      %v709 = vpop.f32.mrf.mxu0
      %v710 = vadd.f32 0.0, %v709
      %v711 = vpop.f32.mrf.mxu0
      %712 = vmatprep.mubr.bf16.mxu0 0
      %713 = vmatmul.mubr.bf16.gmra.mxu0 %v520
      %v714 = vpop.f32.mrf.mxu0
      %v715 = vadd.f32 0.0, %v714
      %v716 = vpop.f32.mrf.mxu0
      %v717 = vpop.f32.mrf.mxu0
      %v718 = vadd.f32 0.0, %v717
      %v719 = vpop.f32.mrf.mxu0
      %720 = vmatprep.mubr.bf16.mxu0 0
      %721 = vmatmul.mubr.bf16.gmra.mxu0 %v523
      %v722 = vpop.f32.mrf.mxu0
      %v723 = vadd.f32 0.0, %v722
      %v724 = vpop.f32.mrf.mxu0
      %v725 = vpop.f32.mrf.mxu0
      %v726 = vadd.f32 0.0, %v725
      %v727 = vpop.f32.mrf.mxu0
      %728 = vmatprep.mubr.bf16.mxu0 0
      %729 = vmatmul.mubr.bf16.gmra.mxu0 %v526
      %v730 = vpop.f32.mrf.mxu0
      %v731 = vadd.f32 0.0, %v730
      %v732 = vpop.f32.mrf.mxu0
      %v733 = vpop.f32.mrf.mxu0
      %v734 = vadd.f32 0.0, %v733
      %v735 = vpop.f32.mrf.mxu0
      %736 = vmatprep.mubr.bf16.mxu0 0
      %737 = vmatmul.mubr.bf16.gmra.mxu0 %v529
      %v738 = vpop.f32.mrf.mxu0
      %v739 = vadd.f32 0.0, %v738
      %v740 = vpop.f32.mrf.mxu0
      %v741 = vpop.f32.mrf.mxu0
      %v742 = vadd.f32 0.0, %v741
      %v743 = vpop.f32.mrf.mxu0
      %744 = vmatprep.mubr.bf16.mxu0 0
      %745 = vmatmul.mubr.bf16.gmra.mxu0 %v532
      %v746 = vpop.f32.mrf.mxu0
      %v747 = vadd.f32 0.0, %v746
      %v748 = vpop.f32.mrf.mxu0
      %v749 = vpop.f32.mrf.mxu0
      %v750 = vadd.f32 0.0, %v749
      %v751 = vpop.f32.mrf.mxu0
      %752 = vmatprep.mubr.bf16.mxu0 0
      %753 = vmatmul.mubr.bf16.gmra.mxu0 %v535
      %v754 = vpop.f32.mrf.mxu0
      %v755 = vadd.f32 0.0, %v754
      %v756 = vpop.f32.mrf.mxu0
      %v757 = vpop.f32.mrf.mxu0
      %v758 = vadd.f32 0.0, %v757
      %v759 = vpop.f32.mrf.mxu0
      %760 = vmatprep.mubr.bf16.mxu0 0
      %761 = vmatmul.mubr.bf16.gmra.mxu0 %v538
      %v762 = vpop.f32.mrf.mxu0
      %v763 = vadd.f32 0.0, %v762
      %v764 = vpop.f32.mrf.mxu0
      %v765 = vpop.f32.mrf.mxu0
      %v766 = vadd.f32 0.0, %v765
      %v767 = vpop.f32.mrf.mxu0
      %768 = vmatprep.mubr.bf16.mxu0 0
      %769 = vmatmul.mubr.bf16.gmra.mxu0 %v541
      %v770 = vpop.f32.mrf.mxu0
      %v771 = vadd.f32 0.0, %v770
      %v772 = vpop.f32.mrf.mxu0
      %v773 = vpop.f32.mrf.mxu0
      %v774 = vadd.f32 0.0, %v773
      %v775 = vpop.f32.mrf.mxu0
      %776 = vmatprep.mubr.bf16.mxu0 0
      %777 = vmatmul.mubr.bf16.gmra.mxu0 %v544
      %v778 = vpop.f32.mrf.mxu0
      %v779 = vadd.f32 0.0, %v778
      %v780 = vpop.f32.mrf.mxu0
      %v781 = vpop.f32.mrf.mxu0
      %v782 = vadd.f32 0.0, %v781
      %v783 = vpop.f32.mrf.mxu0
      %784 = vmatprep.mubr.bf16.mxu0 0
      %785 = vmatmul.mubr.bf16.gmra.mxu0 %v547
      %v786 = vpop.f32.mrf.mxu0
      %v787 = vadd.f32 0.0, %v786
      %v788 = vpop.f32.mrf.mxu0
      %v789 = vpop.f32.mrf.mxu0
      %v790 = vadd.f32 0.0, %v789
      %v791 = vpop.f32.mrf.mxu0
      %792 = vmatprep.mubr.bf16.mxu0 0
      %793 = vmatmul.mubr.bf16.gmra.mxu0 %v550
      %v794 = vpop.f32.mrf.mxu0
      %v795 = vadd.f32 0.0, %v794
      %v796 = vpop.f32.mrf.mxu0
      %v797 = vpop.f32.mrf.mxu0
      %v798 = vadd.f32 0.0, %v797
      %v799 = vpop.f32.mrf.mxu0
      %800 = vmatprep.mubr.bf16.mxu0 0
      %801 = vmatmul.mubr.bf16.gmra.mxu0 %v553
      %v802 = vpop.f32.mrf.mxu0
      %v803 = vadd.f32 0.0, %v802
      %v804 = vpop.f32.mrf.mxu0
      %v805 = vpop.f32.mrf.mxu0
      %v806 = vadd.f32 0.0, %v805
      %v807 = vpop.f32.mrf.mxu0
      %808 = vmatprep.mubr.bf16.mxu0 0
      %809 = vmatmul.mubr.bf16.gmra.mxu0 %v556
      %v810 = vpop.f32.mrf.mxu0
      %v811 = vadd.f32 0.0, %v810
      %v812 = vpop.f32.mrf.mxu0
      %v813 = vpop.f32.mrf.mxu0
      %v814 = vadd.f32 0.0, %v813
      %v815 = vpop.f32.mrf.mxu0
      %816 = vmatprep.mubr.bf16.mxu0 0
      %817 = vmatmul.mubr.bf16.gmra.mxu0 %v559
      %v818 = vpop.f32.mrf.mxu0
      %v819 = vadd.f32 0.0, %v818
      %v820 = vpop.f32.mrf.mxu0
      %v821 = vpop.f32.mrf.mxu0
      %v822 = vadd.f32 0.0, %v821
      %v823 = vpop.f32.mrf.mxu0
      %824 = vmatprep.mubr.bf16.mxu0 0
      %825 = vmatmul.mubr.bf16.gmra.mxu0 %v562
      %v826 = vpop.f32.mrf.mxu0
      %v827 = vadd.f32 0.0, %v826
      %v828 = vpop.f32.mrf.mxu0
      %v829 = vpop.f32.mrf.mxu0
      %v830 = vadd.f32 0.0, %v829
      %v831 = vpop.f32.mrf.mxu0
      %832 = vmatprep.mubr.bf16.mxu0 0
      %833 = vmatmul.mubr.bf16.gmra.mxu0 %v565
      %v834 = vpop.f32.mrf.mxu0
      %v835 = vadd.f32 0.0, %v834
      %v836 = vpop.f32.mrf.mxu0
      %v837 = vpop.f32.mrf.mxu0
      %v838 = vadd.f32 0.0, %v837
      %v839 = vpop.f32.mrf.mxu0
      %840 = vmatprep.mubr.bf16.mxu0 0
      %841 = vmatmul.mubr.bf16.gmra.mxu0 %v568
      %v842 = vpop.f32.mrf.mxu0
      %v843 = vadd.f32 0.0, %v842
      %v844 = vpop.f32.mrf.mxu0
      %v845 = vpop.f32.mrf.mxu0
      %v846 = vadd.f32 0.0, %v845
      %v847 = vpop.f32.mrf.mxu0
      %848 = vmatprep.mubr.bf16.mxu0 0
      %849 = vmatmul.mubr.bf16.gmra.mxu0 %v571
      %v850 = vpop.f32.mrf.mxu0
      %v851 = vadd.f32 0.0, %v850
      %v852 = vpop.f32.mrf.mxu0
      %v853 = vpop.f32.mrf.mxu0
      %v854 = vadd.f32 0.0, %v853
      %v855 = vpop.f32.mrf.mxu0
      %856 = vmatprep.mubr.bf16.mxu0 0
      %857 = vmatmul.mubr.bf16.gmra.mxu0 %v574
      %v858 = vpop.f32.mrf.mxu0
      %v859 = vadd.f32 0.0, %v858
      %v860 = vpop.f32.mrf.mxu0
      %v861 = vpop.f32.mrf.mxu0
      %v862 = vadd.f32 0.0, %v861
      %v863 = vpop.f32.mrf.mxu0
      %864 = vdwg.mxu0
      %v865 = vpack.c.bf16 %v614, %v611
      %v866 = vpack.c.bf16 %v622, %v619
      %v867 = vpack.c.bf16 %v630, %v627
      %v868 = vpack.c.bf16 %v638, %v635
      %v869 = vpack.c.bf16 %v646, %v643
      %v870 = vpack.c.bf16 %v654, %v651
      %v871 = vpack.c.bf16 %v662, %v659
      %v872 = vpack.c.bf16 %v670, %v667
      %v873 = vpack.c.bf16 %v678, %v675
      %v874 = vpack.c.bf16 %v686, %v683
      %v875 = vpack.c.bf16 %v694, %v691
      %v876 = vpack.c.bf16 %v702, %v699
      %v877 = vpack.c.bf16 %v710, %v707
      %v878 = vpack.c.bf16 %v718, %v715
      %v879 = vpack.c.bf16 %v726, %v723
      %v880 = vpack.c.bf16 %v734, %v731
      %v881 = vpack.c.bf16 %v742, %v739
      %v882 = vpack.c.bf16 %v750, %v747
      %v883 = vpack.c.bf16 %v758, %v755
      %v884 = vpack.c.bf16 %v766, %v763
      %v885 = vpack.c.bf16 %v774, %v771
      %v886 = vpack.c.bf16 %v782, %v779
      %v887 = vpack.c.bf16 %v790, %v787
      %v888 = vpack.c.bf16 %v798, %v795
      %v889 = vpack.c.bf16 %v806, %v803
      %v890 = vpack.c.bf16 %v814, %v811
      %v891 = vpack.c.bf16 %v822, %v819
      %v892 = vpack.c.bf16 %v830, %v827
      %v893 = vpack.c.bf16 %v838, %v835
      %v894 = vpack.c.bf16 %v846, %v843
      %v895 = vpack.c.bf16 %v854, %v851
      %v896 = vpack.c.bf16 %v862, %v859
      %v929 = vunpack.c.l.b16 %v865
      %v930 = vunpack.c.h.b16 %v865
      %v931 = vunpack.c.l.b16 %v866
      %v932 = vunpack.c.h.b16 %v866
      %v933 = vunpack.c.l.b16 %v867
      %v934 = vunpack.c.h.b16 %v867
      %v935 = vunpack.c.l.b16 %v868
      %v936 = vunpack.c.h.b16 %v868
      %v937 = vunpack.c.l.b16 %v869
      %v938 = vunpack.c.h.b16 %v869
      %v939 = vunpack.c.l.b16 %v870
      %v940 = vunpack.c.h.b16 %v870
      %v941 = vunpack.c.l.b16 %v871
      %v942 = vunpack.c.h.b16 %v871
      %v943 = vunpack.c.l.b16 %v872
      %v944 = vunpack.c.h.b16 %v872
      %v945 = vunpack.c.l.b16 %v873
      %v946 = vunpack.c.h.b16 %v873
      %v947 = vunpack.c.l.b16 %v874
      %v948 = vunpack.c.h.b16 %v874
      %v949 = vunpack.c.l.b16 %v875
      %v950 = vunpack.c.h.b16 %v875
      %v951 = vunpack.c.l.b16 %v876
      %v952 = vunpack.c.h.b16 %v876
      %v953 = vunpack.c.l.b16 %v877
      %v954 = vunpack.c.h.b16 %v877
      %v955 = vunpack.c.l.b16 %v878
      %v956 = vunpack.c.h.b16 %v878
      %v957 = vunpack.c.l.b16 %v879
      %v958 = vunpack.c.h.b16 %v879
      %v959 = vunpack.c.l.b16 %v880
      %v960 = vunpack.c.h.b16 %v880
      %v961 = vunpack.c.l.b16 %v881
      %v962 = vunpack.c.h.b16 %v881
      %v963 = vunpack.c.l.b16 %v882
      %v964 = vunpack.c.h.b16 %v882
      %v965 = vunpack.c.l.b16 %v883
      %v966 = vunpack.c.h.b16 %v883
      %v967 = vunpack.c.l.b16 %v884
      %v968 = vunpack.c.h.b16 %v884
      %v969 = vunpack.c.l.b16 %v885
      %v970 = vunpack.c.h.b16 %v885
      %v971 = vunpack.c.l.b16 %v886
      %v972 = vunpack.c.h.b16 %v886
      %v973 = vunpack.c.l.b16 %v887
      %v974 = vunpack.c.h.b16 %v887
      %v975 = vunpack.c.l.b16 %v888
      %v976 = vunpack.c.h.b16 %v888
      %v977 = vunpack.c.l.b16 %v889
      %v978 = vunpack.c.h.b16 %v889
      %v979 = vunpack.c.l.b16 %v890
      %v980 = vunpack.c.h.b16 %v890
      %v981 = vunpack.c.l.b16 %v891
      %v982 = vunpack.c.h.b16 %v891
      %v983 = vunpack.c.l.b16 %v892
      %v984 = vunpack.c.h.b16 %v892
      %v985 = vunpack.c.l.b16 %v893
      %v986 = vunpack.c.h.b16 %v893
      %v987 = vunpack.c.l.b16 %v894
      %v988 = vunpack.c.h.b16 %v894
      %v989 = vunpack.c.l.b16 %v895
      %v990 = vunpack.c.h.b16 %v895
      %v991 = vunpack.c.l.b16 %v896
      %v992 = vunpack.c.h.b16 %v896
      %v993 = vpack.c.b16 %v929, %v929
      %v994 = vpack.c.b16 %v930, %v930
      %v995 = vpack.c.b16 %v931, %v931
      %v996 = vpack.c.b16 %v932, %v932
      %v997 = vpack.c.b16 %v933, %v933
      %v998 = vpack.c.b16 %v934, %v934
      %v999 = vpack.c.b16 %v935, %v935
      %v1000 = vpack.c.b16 %v936, %v936
      %v1001 = vpack.c.b16 %v937, %v937
      %v1002 = vpack.c.b16 %v938, %v938
      %v1003 = vpack.c.b16 %v939, %v939
      %v1004 = vpack.c.b16 %v940, %v940
      %v1005 = vpack.c.b16 %v941, %v941
      %v1006 = vpack.c.b16 %v942, %v942
      %v1007 = vpack.c.b16 %v943, %v943
      %v1008 = vpack.c.b16 %v944, %v944
      %v1009 = vpack.c.b16 %v945, %v945
      %v1010 = vpack.c.b16 %v946, %v946
      %v1011 = vpack.c.b16 %v947, %v947
      %v1012 = vpack.c.b16 %v948, %v948
      %v1013 = vpack.c.b16 %v949, %v949
      %v1014 = vpack.c.b16 %v950, %v950
      %v1015 = vpack.c.b16 %v951, %v951
      %v1016 = vpack.c.b16 %v952, %v952
      %v1017 = vpack.c.b16 %v953, %v953
      %v1018 = vpack.c.b16 %v954, %v954
      %v1019 = vpack.c.b16 %v955, %v955
      %v1020 = vpack.c.b16 %v956, %v956
      %v1021 = vpack.c.b16 %v957, %v957
      %v1022 = vpack.c.b16 %v958, %v958
      %v1023 = vpack.c.b16 %v959, %v959
      %v1024 = vpack.c.b16 %v960, %v960
      %v1025 = vpack.c.b16 %v961, %v961
      %v1026 = vpack.c.b16 %v962, %v962
      %v1027 = vpack.c.b16 %v963, %v963
      %v1028 = vpack.c.b16 %v964, %v964
      %v1029 = vpack.c.b16 %v965, %v965
      %v1030 = vpack.c.b16 %v966, %v966
      %v1031 = vpack.c.b16 %v967, %v967
      %v1032 = vpack.c.b16 %v968, %v968
      %v1033 = vpack.c.b16 %v969, %v969
      %v1034 = vpack.c.b16 %v970, %v970
      %v1035 = vpack.c.b16 %v971, %v971
      %v1036 = vpack.c.b16 %v972, %v972
      %v1037 = vpack.c.b16 %v973, %v973
      %v1038 = vpack.c.b16 %v974, %v974
      %v1039 = vpack.c.b16 %v975, %v975
      %v1040 = vpack.c.b16 %v976, %v976
      %v1041 = vpack.c.b16 %v977, %v977
      %v1042 = vpack.c.b16 %v978, %v978
      %v1043 = vpack.c.b16 %v979, %v979
      %v1044 = vpack.c.b16 %v980, %v980
      %v1045 = vpack.c.b16 %v981, %v981
      %v1046 = vpack.c.b16 %v982, %v982
      %v1047 = vpack.c.b16 %v983, %v983
      %v1048 = vpack.c.b16 %v984, %v984
      %v1049 = vpack.c.b16 %v985, %v985
      %v1050 = vpack.c.b16 %v986, %v986
      %v1051 = vpack.c.b16 %v987, %v987
      %v1052 = vpack.c.b16 %v988, %v988
      %v1053 = vpack.c.b16 %v989, %v989
      %v1054 = vpack.c.b16 %v990, %v990
      %v1055 = vpack.c.b16 %v991, %v991
      %v1056 = vpack.c.b16 %v992, %v992
      %1121 = vst [vmem:[%s238] sm:$0xf] %v993
      %1122 = vst [vmem:[%s238 + $0x4] sm:$0xf] %v994
      %1123 = vst [vmem:[%s238 + $0x8] sm:$0xf] %v995
      %1124 = vst [vmem:[%s238 + $0xc] sm:$0xf] %v996
      %1125 = vst [vmem:[%s238 + $0x10] sm:$0xf] %v997
      %1126 = vst [vmem:[%s238 + $0x14] sm:$0xf] %v998
      %1127 = vst [vmem:[%s238 + $0x18] sm:$0xf] %v999
      %1128 = vst [vmem:[%s238 + $0x1c] sm:$0xf] %v1000
      %1129 = vst [vmem:[%s238 + $0x20] sm:$0xf] %v1001
      %1130 = vst [vmem:[%s238 + $0x24] sm:$0xf] %v1002
      %1131 = vst [vmem:[%s238 + $0x28] sm:$0xf] %v1003
      %1132 = vst [vmem:[%s238 + $0x2c] sm:$0xf] %v1004
      %1133 = vst [vmem:[%s238 + $0x30] sm:$0xf] %v1005
      %1134 = vst [vmem:[%s238 + $0x34] sm:$0xf] %v1006
      %1135 = vst [vmem:[%s238 + $0x38] sm:$0xf] %v1007
      %1136 = vst [vmem:[%s238 + $0x3c] sm:$0xf] %v1008
      %1137 = vst [vmem:[%s238 + $0x40] sm:$0xf] %v1009
      %1138 = vst [vmem:[%s238 + $0x44] sm:$0xf] %v1010
      %1139 = vst [vmem:[%s238 + $0x48] sm:$0xf] %v1011
      %1140 = vst [vmem:[%s238 + $0x4c] sm:$0xf] %v1012
      %1141 = vst [vmem:[%s238 + $0x50] sm:$0xf] %v1013
      %1142 = vst [vmem:[%s238 + $0x54] sm:$0xf] %v1014
      %1143 = vst [vmem:[%s238 + $0x58] sm:$0xf] %v1015
      %1144 = vst [vmem:[%s238 + $0x5c] sm:$0xf] %v1016
      %1145 = vst [vmem:[%s238 + $0x60] sm:$0xf] %v1017
      %1146 = vst [vmem:[%s238 + $0x64] sm:$0xf] %v1018
      %1147 = vst [vmem:[%s238 + $0x68] sm:$0xf] %v1019
      %1148 = vst [vmem:[%s238 + $0x6c] sm:$0xf] %v1020
      %1149 = vst [vmem:[%s238 + $0x70] sm:$0xf] %v1021
      %1150 = vst [vmem:[%s238 + $0x74] sm:$0xf] %v1022
      %1151 = vst [vmem:[%s238 + $0x78] sm:$0xf] %v1023
      %1152 = vst [vmem:[%s238 + $0x7c] sm:$0xf] %v1024
      %1153 = vst [vmem:[%s238 + $0x80] sm:$0xf] %v1025
      %1154 = vst [vmem:[%s238 + $0x84] sm:$0xf] %v1026
      %1155 = vst [vmem:[%s238 + $0x88] sm:$0xf] %v1027
      %1156 = vst [vmem:[%s238 + $0x8c] sm:$0xf] %v1028
      %1157 = vst [vmem:[%s238 + $0x90] sm:$0xf] %v1029
      %1158 = vst [vmem:[%s238 + $0x94] sm:$0xf] %v1030
      %1159 = vst [vmem:[%s238 + $0x98] sm:$0xf] %v1031
      %1160 = vst [vmem:[%s238 + $0x9c] sm:$0xf] %v1032
      %1161 = vst [vmem:[%s238 + $0xa0] sm:$0xf] %v1033
      %1162 = vst [vmem:[%s238 + $0xa4] sm:$0xf] %v1034
      %1163 = vst [vmem:[%s238 + $0xa8] sm:$0xf] %v1035
      %1164 = vst [vmem:[%s238 + $0xac] sm:$0xf] %v1036
      %1165 = vst [vmem:[%s238 + $0xb0] sm:$0xf] %v1037
      %1166 = vst [vmem:[%s238 + $0xb4] sm:$0xf] %v1038
      %1167 = vst [vmem:[%s238 + $0xb8] sm:$0xf] %v1039
      %1168 = vst [vmem:[%s238 + $0xbc] sm:$0xf] %v1040
      %1169 = vst [vmem:[%s238 + $0xc0] sm:$0xf] %v1041
      %1170 = vst [vmem:[%s238 + $0xc4] sm:$0xf] %v1042
      %1171 = vst [vmem:[%s238 + $0xc8] sm:$0xf] %v1043
      %1172 = vst [vmem:[%s238 + $0xcc] sm:$0xf] %v1044
      %1173 = vst [vmem:[%s238 + $0xd0] sm:$0xf] %v1045
      %1174 = vst [vmem:[%s238 + $0xd4] sm:$0xf] %v1046
      %1175 = vst [vmem:[%s238 + $0xd8] sm:$0xf] %v1047
      %1176 = vst [vmem:[%s238 + $0xdc] sm:$0xf] %v1048
      %1177 = vst [vmem:[%s238 + $0xe0] sm:$0xf] %v1049
      %1178 = vst [vmem:[%s238 + $0xe4] sm:$0xf] %v1050
      %1179 = vst [vmem:[%s238 + $0xe8] sm:$0xf] %v1051
      %1180 = vst [vmem:[%s238 + $0xec] sm:$0xf] %v1052
      %1181 = vst [vmem:[%s238 + $0xf0] sm:$0xf] %v1053
      %1182 = vst [vmem:[%s238 + $0xf4] sm:$0xf] %v1054
      %1183 = vst [vmem:[%s238 + $0xf8] sm:$0xf] %v1055
      %1184 = vst [vmem:[%s238 + $0xfc] sm:$0xf] %v1056
      %v1185 = vadd.f32 %v611, %v614
      %v1186 = vadd.f32 %v1185, %v619
      %v1187 = vadd.f32 %v1186, %v622
      %v1188 = vadd.f32 %v1187, %v627
      %v1189 = vadd.f32 %v1188, %v630
      %v1190 = vadd.f32 %v1189, %v635
      %v1191 = vadd.f32 %v1190, %v638
      %v1192 = vadd.f32 %v1191, %v643
      %v1193 = vadd.f32 %v1192, %v646
      %v1194 = vadd.f32 %v1193, %v651
      %v1195 = vadd.f32 %v1194, %v654
      %v1196 = vadd.f32 %v1195, %v659
      %v1197 = vadd.f32 %v1196, %v662
      %v1198 = vadd.f32 %v1197, %v667
      %v1199 = vadd.f32 %v1198, %v670
      %v1200 = vadd.f32 %v1199, %v675
      %v1201 = vadd.f32 %v1200, %v678
      %v1202 = vadd.f32 %v1201, %v683
      %v1203 = vadd.f32 %v1202, %v686
      %v1204 = vadd.f32 %v1203, %v691
      %v1205 = vadd.f32 %v1204, %v694
      %v1206 = vadd.f32 %v1205, %v699
      %v1207 = vadd.f32 %v1206, %v702
      %v1208 = vadd.f32 %v1207, %v707
      %v1209 = vadd.f32 %v1208, %v710
      %v1210 = vadd.f32 %v1209, %v715
      %v1211 = vadd.f32 %v1210, %v718
      %v1212 = vadd.f32 %v1211, %v723
      %v1213 = vadd.f32 %v1212, %v726
      %v1214 = vadd.f32 %v1213, %v731
      %v1215 = vadd.f32 %v1214, %v734
      %v1216 = vadd.f32 %v1215, %v739
      %v1217 = vadd.f32 %v1216, %v742
      %v1218 = vadd.f32 %v1217, %v747
      %v1219 = vadd.f32 %v1218, %v750
      %v1220 = vadd.f32 %v1219, %v755
      %v1221 = vadd.f32 %v1220, %v758
      %v1222 = vadd.f32 %v1221, %v763
      %v1223 = vadd.f32 %v1222, %v766
      %v1224 = vadd.f32 %v1223, %v771
      %v1225 = vadd.f32 %v1224, %v774
      %v1226 = vadd.f32 %v1225, %v779
      %v1227 = vadd.f32 %v1226, %v782
      %v1228 = vadd.f32 %v1227, %v787
      %v1229 = vadd.f32 %v1228, %v790
      %v1230 = vadd.f32 %v1229, %v795
      %v1231 = vadd.f32 %v1230, %v798
      %v1232 = vadd.f32 %v1231, %v803
      %v1233 = vadd.f32 %v1232, %v806
      %v1234 = vadd.f32 %v1233, %v811
      %v1235 = vadd.f32 %v1234, %v814
      %v1236 = vadd.f32 %v1235, %v819
      %v1237 = vadd.f32 %v1236, %v822
      %v1238 = vadd.f32 %v1237, %v827
      %v1239 = vadd.f32 %v1238, %v830
      %v1240 = vadd.f32 %v1239, %v835
      %v1241 = vadd.f32 %v1240, %v838
      %v1242 = vadd.f32 %v1241, %v843
      %v1243 = vadd.f32 %v1242, %v846
      %v1244 = vadd.f32 %v1243, %v851
      %v1245 = vadd.f32 %v1244, %v854
      %v1246 = vadd.f32 %v1245, %v859
      %v1247 = vadd.f32 %v1246, %v862
      %v1248 = vrot.slane %v1247, 4
      %v1249 = vadd.f32 %v1247, %v1248
      %v1250 = vrot.slane %v1249, 2
      %v1251 = vadd.f32 %v1249, %v1250
      %v1252 = vrot.slane %v1251, 1
      %v1253 = vadd.f32 %v1251, %v1252
      %v1254 = vmul.f32 %v611, %v611
      %v1255 = vmul.f32 %v614, %v614
      %v1256 = vmul.f32 %v619, %v619
      %v1257 = vmul.f32 %v622, %v622
      %v1258 = vmul.f32 %v627, %v627
      %v1259 = vmul.f32 %v630, %v630
      %v1260 = vmul.f32 %v635, %v635
      %v1261 = vmul.f32 %v638, %v638
      %v1262 = vmul.f32 %v643, %v643
      %v1263 = vmul.f32 %v646, %v646
      %v1264 = vmul.f32 %v651, %v651
      %v1265 = vmul.f32 %v654, %v654
      %v1266 = vmul.f32 %v659, %v659
      %v1267 = vmul.f32 %v662, %v662
      %v1268 = vmul.f32 %v667, %v667
      %v1269 = vmul.f32 %v670, %v670
      %v1270 = vmul.f32 %v675, %v675
      %v1271 = vmul.f32 %v678, %v678
      %v1272 = vmul.f32 %v683, %v683
      %v1273 = vmul.f32 %v686, %v686
      %v1274 = vmul.f32 %v691, %v691
      %v1275 = vmul.f32 %v694, %v694
      %v1276 = vmul.f32 %v699, %v699
      %v1277 = vmul.f32 %v702, %v702
      %v1278 = vmul.f32 %v707, %v707
      %v1279 = vmul.f32 %v710, %v710
      %v1280 = vmul.f32 %v715, %v715
      %v1281 = vmul.f32 %v718, %v718
      %v1282 = vmul.f32 %v723, %v723
      %v1283 = vmul.f32 %v726, %v726
      %v1284 = vmul.f32 %v731, %v731
      %v1285 = vmul.f32 %v734, %v734
      %v1286 = vmul.f32 %v739, %v739
      %v1287 = vmul.f32 %v742, %v742
      %v1288 = vmul.f32 %v747, %v747
      %v1289 = vmul.f32 %v750, %v750
      %v1290 = vmul.f32 %v755, %v755
      %v1291 = vmul.f32 %v758, %v758
      %v1292 = vmul.f32 %v763, %v763
      %v1293 = vmul.f32 %v766, %v766
      %v1294 = vmul.f32 %v771, %v771
      %v1295 = vmul.f32 %v774, %v774
      %v1296 = vmul.f32 %v779, %v779
      %v1297 = vmul.f32 %v782, %v782
      %v1298 = vmul.f32 %v787, %v787
      %v1299 = vmul.f32 %v790, %v790
      %v1300 = vmul.f32 %v795, %v795
      %v1301 = vmul.f32 %v798, %v798
      %v1302 = vmul.f32 %v803, %v803
      %v1303 = vmul.f32 %v806, %v806
      %v1304 = vmul.f32 %v811, %v811
      %v1305 = vmul.f32 %v814, %v814
      %v1306 = vmul.f32 %v819, %v819
      %v1307 = vmul.f32 %v822, %v822
      %v1308 = vmul.f32 %v827, %v827
      %v1309 = vmul.f32 %v830, %v830
      %v1310 = vmul.f32 %v835, %v835
      %v1311 = vmul.f32 %v838, %v838
      %v1312 = vmul.f32 %v843, %v843
      %v1313 = vmul.f32 %v846, %v846
      %v1314 = vmul.f32 %v851, %v851
      %v1315 = vmul.f32 %v854, %v854
      %v1316 = vmul.f32 %v859, %v859
      %v1317 = vmul.f32 %v862, %v862
      %v1318 = vadd.f32 %v1254, %v1255
      %v1319 = vadd.f32 %v1318, %v1256
      %v1320 = vadd.f32 %v1319, %v1257
      %v1321 = vadd.f32 %v1320, %v1258
      %v1322 = vadd.f32 %v1321, %v1259
      %v1323 = vadd.f32 %v1322, %v1260
      %v1324 = vadd.f32 %v1323, %v1261
      %v1325 = vadd.f32 %v1324, %v1262
      %v1326 = vadd.f32 %v1325, %v1263
      %v1327 = vadd.f32 %v1326, %v1264
      %v1328 = vadd.f32 %v1327, %v1265
      %v1329 = vadd.f32 %v1328, %v1266
      %v1330 = vadd.f32 %v1329, %v1267
      %v1331 = vadd.f32 %v1330, %v1268
      %v1332 = vadd.f32 %v1331, %v1269
      %v1333 = vadd.f32 %v1332, %v1270
      %v1334 = vadd.f32 %v1333, %v1271
      %v1335 = vadd.f32 %v1334, %v1272
      %v1336 = vadd.f32 %v1335, %v1273
      %v1337 = vadd.f32 %v1336, %v1274
      %v1338 = vadd.f32 %v1337, %v1275
      %v1339 = vadd.f32 %v1338, %v1276
      %v1340 = vadd.f32 %v1339, %v1277
      %v1341 = vadd.f32 %v1340, %v1278
      %v1342 = vadd.f32 %v1341, %v1279
      %v1343 = vadd.f32 %v1342, %v1280
      %v1344 = vadd.f32 %v1343, %v1281
      %v1345 = vadd.f32 %v1344, %v1282
      %v1346 = vadd.f32 %v1345, %v1283
      %v1347 = vadd.f32 %v1346, %v1284
      %v1348 = vadd.f32 %v1347, %v1285
      %v1349 = vadd.f32 %v1348, %v1286
      %v1350 = vadd.f32 %v1349, %v1287
      %v1351 = vadd.f32 %v1350, %v1288
      %v1352 = vadd.f32 %v1351, %v1289
      %v1353 = vadd.f32 %v1352, %v1290
      %v1354 = vadd.f32 %v1353, %v1291
      %v1355 = vadd.f32 %v1354, %v1292
      %v1356 = vadd.f32 %v1355, %v1293
      %v1357 = vadd.f32 %v1356, %v1294
      %v1358 = vadd.f32 %v1357, %v1295
      %v1359 = vadd.f32 %v1358, %v1296
      %v1360 = vadd.f32 %v1359, %v1297
      %v1361 = vadd.f32 %v1360, %v1298
      %v1362 = vadd.f32 %v1361, %v1299
      %v1363 = vadd.f32 %v1362, %v1300
      %v1364 = vadd.f32 %v1363, %v1301
      %v1365 = vadd.f32 %v1364, %v1302
      %v1366 = vadd.f32 %v1365, %v1303
      %v1367 = vadd.f32 %v1366, %v1304
      %v1368 = vadd.f32 %v1367, %v1305
      %v1369 = vadd.f32 %v1368, %v1306
      %v1370 = vadd.f32 %v1369, %v1307
      %v1371 = vadd.f32 %v1370, %v1308
      %v1372 = vadd.f32 %v1371, %v1309
      %v1373 = vadd.f32 %v1372, %v1310
      %v1374 = vadd.f32 %v1373, %v1311
      %v1375 = vadd.f32 %v1374, %v1312
      %v1376 = vadd.f32 %v1375, %v1313
      %v1377 = vadd.f32 %v1376, %v1314
      %v1378 = vadd.f32 %v1377, %v1315
      %v1379 = vadd.f32 %v1378, %v1316
      %v1380 = vadd.f32 %v1379, %v1317
      %v1381 = vrot.slane %v1380, 4
      %v1382 = vadd.f32 %v1380, %v1381
      %v1383 = vrot.slane %v1382, 2
      %v1384 = vadd.f32 %v1382, %v1383
      %v1385 = vrot.slane %v1384, 1
      %v1386 = vadd.f32 %v1384, %v1385
      %v1387 = vlaneseq
      %v1388 = vshrl.u32 %v1387, 7
      %vm1389 = vcmp.eq.s32.totalorder %v1388, 0
      %v1390 = vsel %vm1389, %v1253, 0.0
      %vm1391 = vcmp.eq.s32.totalorder %v1388, 1
      %v1392 = vsel %vm1391, %v1386, 0.0
      %v1393 = vadd.f32 %v1390, %v1392
      %1394 = vst [vmem:[%s244] sm:$0xff] %v1393
      %s1395 = smul.u32 64, %s20
      %p1396 = scmp.lt.s32.totalorder %s19, 3
      %s1397 = scalar_select %p1396, %s19, 3
      %p1398 = scmp.lt.s32.totalorder %s1395, 63
      %s1399 = scalar_select %p1398, %s1395, 63
      %s1400 = smul.addr %s1397, 64
      %s1401 = sadd.s32 %s1399, %s1400
      %s1402 = smul.addr %s1401, 4
      %s1403 = scalar_lea.vmem %s2, %s1402
      %s1404 = sadd.s32 %s19, %s20
      %p1405 = scmp.lt.s32.totalorder %s1404, 3
      %s1406 = scalar_select %p1405, %s1404, 3
      %s1407 = smul.addr %s1406, 8
      %s1408 = scalar_lea.vmem %s3, %s1407
      // Predicated region
      $region29: #{upconv_block.2} parent=27 // pred_check
        %p1409 = pneg %p101
      $region30: #{upconv_block.2} parent=27 // pred_check_branch
        %1411 = sbr.rel (%p1409) target = $region32
      $region31: #{upconv_block.2} parent=27 // pred_region
        %s1412 = smul.u32 64, %s20
      $region32: #{upconv_block.2} parent=27 // pred_fallthru
        _
      // Predicated region
      $region33: #{upconv_block.2} parent=27 // pred_check
        %p1413 = pneg %p129
      $region34: #{upconv_block.2} parent=27 // pred_check_branch
        %1415 = sbr.rel (%p1413) target = $region36
      $region35: #{upconv_block.2} parent=27 // pred_region
        %s1416 = sadd.s32 %s19, %s20
      $region36: #{upconv_block.2} parent=27 // pred_fallthru
        _
    $region28: #{upconv_block.2} parent=5 // pred_fallthru
      _
    %p1417 = scmp.le.s32.totalorder 2, %s10
    // Predicated region
    $region37: #{upconv_block.2} parent=5 // pred_check
      %p1418 = pneg %p1417
    $region38: #{upconv_block.2} parent=5 // pred_check_branch
      %1420 = sbr.rel (%p1418) target = $region40
    $region39: #{upconv_block.2} parent=5 // pred_region
      %s1421 = ssub.s32 %s10, 2
      // Predicated region
      $region41: #{upconv_block.2} parent=39 // pred_check
        %p1422 = pneg %p107
      $region42: #{upconv_block.2} parent=39 // pred_check_branch
        %1424 = sbr.rel (%p1422) target = $region44
      $region43: #{upconv_block.2} parent=39 // pred_region
        %s1425 = smul.u32 64, %s22
        %p1426 = scmp.lt.s32.totalorder %s21, 3
        %s1427 = scalar_select %p1426, %s21, 3
        %p1428 = scmp.lt.s32.totalorder %s1425, 63
        %s1429 = scalar_select %p1428, %s1425, 63
        %s1430 = smul.addr %s1427, 64
        %s1431 = sadd.s32 %s1429, %s1430
        %s1432 = smul.addr %s1431, 4
        %s1433 = scalar_lea.vmem %s2, %s1432
      $region44: #{upconv_block.2} parent=39 // pred_fallthru
        _
      // Predicated region
      $region45: #{upconv_block.2} parent=39 // pred_check
        %p1434 = pneg %p135
      $region46: #{upconv_block.2} parent=39 // pred_check_branch
        %1436 = sbr.rel (%p1434) target = $region48
      $region47: #{upconv_block.2} parent=39 // pred_region
        %s1437 = sadd.s32 %s21, %s22
        %p1438 = scmp.lt.s32.totalorder %s1437, 3
        %s1439 = scalar_select %p1438, %s1437, 3
        %s1440 = smul.addr %s1439, 8
        %s1441 = scalar_lea.vmem %s3, %s1440
      $region48: #{upconv_block.2} parent=39 // pred_fallthru
        _
    $region40: #{upconv_block.2} parent=5 // pred_fallthru
      _
  $region6: #{upconv_block.2} parent=0 // loop_footer
    %s14 = sadd.s32 1, %s10
  $region7: #{upconv_block.2} parent=0 // loop_footer_branch
    %9 = sbr.rel target = $region3
  $region8: #{upconv_block.2} parent=0 // loop_exit
    _

// kernel: upconv_block.3
$region0: #{upconv_block.3}
  #allocation0 [shape = 'u32[]', space=smem, size = 0x4, offset = 0x4, fixed_abs, tag = 'smem constant byte address 0x4 - core index']
  #allocation1 [shape = 'u32[144,128]{1,0:T(1,128)}', space=vmem, size = 0x12000, scoped, tag = 'internal scratch']
  %s0 = inlined_call_operand.vmem [shape: bf16[2048,128], index: 0, kind: input, shape index: {}]
  %s1 = inlined_call_operand.vmem [shape: f32[1,128], index: 1, kind: input, shape index: {}]
  %s2 = inlined_call_operand.vmem [shape: f32[1,128], index: 2, kind: input, shape index: {}]
  %s3 = inlined_call_operand.vmem [shape: f32[2048,128], index: 3, kind: output, shape index: {}]
  %s4 = sld [smem:[#allocation0]]
  $region45: #{upconv_block.3} parent=0
    _
  %s6 = ssub.s32 1, %s4
  %s7 = scalar_select 0, %s6, %s4
  loop: start=0, step=1, limit=6
  $region2: #{upconv_block.3} parent=0 // loop_pre_header
    _
  $region3: #{upconv_block.3} parent=0 // loop_header
    %s9 = sphi 0, %s13
    %p10 = scmp.ge.s32.totalorder %s9, 6
    %s19 = sphi 0, %s21
    %s22 = sphi 0, %s19
    %s23 = sphi 0, %s22
    %s39 = sphi 0, %s23
    %s43 = sphi 0, %s43
    %s45 = sphi 0, %s43
    %s46 = sphi 0, %s45
    %s60 = sphi 0, %s46
    %s64 = sphi 0, %s64
    %s66 = sphi 0, %s64
    %s67 = sphi 0, %s66
    %s81 = sphi 0, %s67
    %s87 = sphi 0, %s89
    %s90 = sphi 0, %s87
    %s91 = sphi 0, %s90
    %s107 = sphi 0, %s91
  $region4: #{upconv_block.3} parent=0 // loop_header_branch
    %12 = sbr.rel (%p10) target = $region8
  $region5: #{upconv_block.3} parent=0 // loop_body
    %s14 = ssub.s32 %s9, 1
    %s15 = ssub.s32 %s9, 2
    %s16 = sadd.s32 %s9, 1
    %s17 = ssub.s32 %s9, %s16
    %p18 = scmp.eq.s32.totalorder %s17, 0
    %s20 = sadd.s32 %s19, 1
    %s21 = scalar_select %p18, %s19, %s20
    %p24 = pneg %p18
    %p25 = scmp.eq.s32.totalorder %s9, 3
    %p26 = por %p24, %p25
    %p27 = scmp.ne.s32.totalorder %s19, %s22
    %p28 = scmp.eq.s32.totalorder %s9, 0
    %p29 = por %p27, %p28
    %p30 = scmp.ne.s32.totalorder %s19, %s22
    %p31 = scmp.eq.s32.totalorder %s14, 3
    %p32 = por %p30, %p31
    %p33 = scmp.ne.s32.totalorder %s22, %s23
    %p34 = scmp.eq.s32.totalorder %s14, 0
    %p35 = por %p33, %p34
    %p36 = scmp.ne.s32.totalorder %s22, %s23
    %p37 = scmp.eq.s32.totalorder %s15, 3
    %p38 = por %p36, %p37
    %p40 = scmp.ne.s32.totalorder %s23, %s39
    %p41 = scmp.eq.s32.totalorder %s15, 0
    %p42 = por %p40, %p41
    %s44 = sadd.s32 %s43, 1
    %p47 = scmp.eq.s32.totalorder %s9, 3
    %p48 = scmp.ne.s32.totalorder %s43, %s45
    %p49 = scmp.eq.s32.totalorder %s9, 0
    %p50 = por %p48, %p49
    %p51 = scmp.ne.s32.totalorder %s43, %s45
    %p52 = scmp.eq.s32.totalorder %s14, 3
    %p53 = por %p51, %p52
    %p54 = scmp.ne.s32.totalorder %s45, %s46
    %p55 = scmp.eq.s32.totalorder %s14, 0
    %p56 = por %p54, %p55
    %p57 = scmp.ne.s32.totalorder %s45, %s46
    %p58 = scmp.eq.s32.totalorder %s15, 3
    %p59 = por %p57, %p58
    %p61 = scmp.ne.s32.totalorder %s46, %s60
    %p62 = scmp.eq.s32.totalorder %s15, 0
    %p63 = por %p61, %p62
    %s65 = sadd.s32 %s64, 1
    %p68 = scmp.eq.s32.totalorder %s9, 3
    %p69 = scmp.ne.s32.totalorder %s64, %s66
    %p70 = scmp.eq.s32.totalorder %s9, 0
    %p71 = por %p69, %p70
    %p72 = scmp.ne.s32.totalorder %s64, %s66
    %p73 = scmp.eq.s32.totalorder %s14, 3
    %p74 = por %p72, %p73
    %p75 = scmp.ne.s32.totalorder %s66, %s67
    %p76 = scmp.eq.s32.totalorder %s14, 0
    %p77 = por %p75, %p76
    %p78 = scmp.ne.s32.totalorder %s66, %s67
    %p79 = scmp.eq.s32.totalorder %s15, 3
    %p80 = por %p78, %p79
    %p82 = scmp.ne.s32.totalorder %s67, %s81
    %p83 = scmp.eq.s32.totalorder %s15, 0
    %p84 = por %p82, %p83
    %s85 = ssub.s32 %s9, %s16
    %p86 = scmp.eq.s32.totalorder %s85, 0
    %s88 = sadd.s32 %s87, 1
    %s89 = scalar_select %p86, %s87, %s88
    %p92 = pneg %p86
    %p93 = scmp.eq.s32.totalorder %s9, 3
    %p94 = por %p92, %p93
    %p95 = scmp.ne.s32.totalorder %s87, %s90
    %p96 = scmp.eq.s32.totalorder %s9, 0
    %p97 = por %p95, %p96
    %p98 = scmp.ne.s32.totalorder %s87, %s90
    %p99 = scmp.eq.s32.totalorder %s14, 3
    %p100 = por %p98, %p99
    %p101 = scmp.ne.s32.totalorder %s90, %s91
    %p102 = scmp.eq.s32.totalorder %s14, 0
    %p103 = por %p101, %p102
    %p104 = scmp.ne.s32.totalorder %s90, %s91
    %p105 = scmp.eq.s32.totalorder %s15, 3
    %p106 = por %p104, %p105
    %p108 = scmp.ne.s32.totalorder %s91, %s107
    %p109 = scmp.eq.s32.totalorder %s15, 0
    %p110 = por %p108, %p109
    %p111 = scmp.le.s32.totalorder 1, %s9
    %p112 = scmp.lt.s32.totalorder %s9, 5
    %p113 = pnand %p111, %p112
    %p114 = pneg %p113
    // Predicated region
    $region9: #{upconv_block.3} parent=5 // pred_check
      _
    $region10: #{upconv_block.3} parent=5 // pred_check_branch
      %116 = sbr.rel (%p113) target = $region12
    $region11: #{upconv_block.3} parent=5 // pred_region
      %s117 = ssub.s32 %s9, 1
      // Predicated region
      $region13: #{upconv_block.3} parent=11 // pred_check
        %p118 = pneg %p56
      $region14: #{upconv_block.3} parent=11 // pred_check_branch
        %120 = sbr.rel (%p118) target = $region16
      $region15: #{upconv_block.3} parent=11 // pred_region
        _
      $region16: #{upconv_block.3} parent=11 // pred_fallthru
        _
      // Predicated region
      $region17: #{upconv_block.3} parent=11 // pred_check
        %p121 = pneg %p77
      $region18: #{upconv_block.3} parent=11 // pred_check_branch
        %123 = sbr.rel (%p121) target = $region20
      $region19: #{upconv_block.3} parent=11 // pred_region
        _
      $region20: #{upconv_block.3} parent=11 // pred_fallthru
        _
    $region12: #{upconv_block.3} parent=5 // pred_fallthru
      _
    %p124 = scmp.lt.s32.totalorder %s9, 4
    // Predicated region
    $region21: #{upconv_block.3} parent=5 // pred_check
      %p125 = pneg %p124
    $region22: #{upconv_block.3} parent=5 // pred_check_branch
      %127 = sbr.rel (%p125) target = $region24
    $region23: #{upconv_block.3} parent=5 // pred_region
      // Predicated region
      $region25: #{upconv_block.3} parent=23 // pred_check
        %p128 = pneg %p29
      $region26: #{upconv_block.3} parent=23 // pred_check_branch
        %130 = sbr.rel (%p128) target = $region28
      $region27: #{upconv_block.3} parent=23 // pred_region
        %s131 = smul.u32 64, %s9
        %p132 = scmp.lt.s32.totalorder %s131, 255
        %s133 = scalar_select %p132, %s131, 255
        %s134 = smul.addr %s133, 4
        %s135 = scalar_lea.vmem %s0, %s134
        %s136 = smul.u32 64, %s9
      $region28: #{upconv_block.3} parent=23 // pred_fallthru
        _
    $region24: #{upconv_block.3} parent=5 // pred_fallthru
      _
    %p137 = scmp.le.s32.totalorder 1, %s9
    %p138 = scmp.lt.s32.totalorder %s9, 5
    %p139 = pnand %p137, %p138
    %p140 = pneg %p139
    // Predicated region
    $region29: #{upconv_block.3} parent=5 // pred_check
      _
    $region30: #{upconv_block.3} parent=5 // pred_check_branch
      %142 = sbr.rel (%p139) target = $region32
    $region31: #{upconv_block.3} parent=5 // pred_region
      %s143 = ssub.s32 %s9, 1
      %s144 = smul.u32 64, %s14
      %p145 = scmp.lt.s32.totalorder %s144, 255
      %s146 = scalar_select %p145, %s144, 255
      %s147 = smul.addr %s146, 4
      %s148 = scalar_lea.vmem %s0, %s147
      %p149 = pneg %p35
      %p150 = pneg %p32
      %p151 = pneg %p56
      %p152 = pneg %p53
      %p153 = pneg %p77
      %p154 = pneg %p74
      %p155 = pneg %p103
      %p156 = pneg %p100
      %s157 = smul.u32 64, %s14
      %p158 = scmp.lt.s32.totalorder %s157, 255
      %s159 = scalar_select %p158, %s157, 255
      %s160 = smul.addr %s159, 8
      %s161 = scalar_lea.vmem %s3, %s160
      %s162 = smul.u32 64, %s14
      %p163 = scmp.lt.s32.totalorder %s162, 255
      %s164 = scalar_select %p163, %s162, 255
      %s165 = smul.addr %s164, 4
      %s166 = scalar_lea.vmem %s0, %s165
      %s167 = smul.u32 64, %s14
      %s168 = smul.u32 64, %s14
      %p169 = scmp.lt.s32.totalorder %s168, 255
      %s170 = scalar_select %p169, %s168, 255
      %s171 = smul.addr %s170, 8
      %s172 = scalar_lea.vmem %s3, %s171
      %s173 = smul.u32 64, %s14
      %v174 = vld [vmem:[%s166] sm:$0xf]
      %v175 = vld [vmem:[%s166 + $0x4] sm:$0xf]
      %v176 = vld [vmem:[%s166 + $0x8] sm:$0xf]
      %v177 = vld [vmem:[%s166 + $0xc] sm:$0xf]
      %v178 = vld [vmem:[%s166 + $0x10] sm:$0xf]
      %v179 = vld [vmem:[%s166 + $0x14] sm:$0xf]
      %v180 = vld [vmem:[%s166 + $0x18] sm:$0xf]
      %v181 = vld [vmem:[%s166 + $0x1c] sm:$0xf]
      %v182 = vld [vmem:[%s166 + $0x20] sm:$0xf]
      %v183 = vld [vmem:[%s166 + $0x24] sm:$0xf]
      %v184 = vld [vmem:[%s166 + $0x28] sm:$0xf]
      %v185 = vld [vmem:[%s166 + $0x2c] sm:$0xf]
      %v186 = vld [vmem:[%s166 + $0x30] sm:$0xf]
      %v187 = vld [vmem:[%s166 + $0x34] sm:$0xf]
      %v188 = vld [vmem:[%s166 + $0x38] sm:$0xf]
      %v189 = vld [vmem:[%s166 + $0x3c] sm:$0xf]
      %v190 = vld [vmem:[%s166 + $0x40] sm:$0xf]
      %v191 = vld [vmem:[%s166 + $0x44] sm:$0xf]
      %v192 = vld [vmem:[%s166 + $0x48] sm:$0xf]
      %v193 = vld [vmem:[%s166 + $0x4c] sm:$0xf]
      %v194 = vld [vmem:[%s166 + $0x50] sm:$0xf]
      %v195 = vld [vmem:[%s166 + $0x54] sm:$0xf]
      %v196 = vld [vmem:[%s166 + $0x58] sm:$0xf]
      %v197 = vld [vmem:[%s166 + $0x5c] sm:$0xf]
      %v198 = vld [vmem:[%s166 + $0x60] sm:$0xf]
      %v199 = vld [vmem:[%s166 + $0x64] sm:$0xf]
      %v200 = vld [vmem:[%s166 + $0x68] sm:$0xf]
      %v201 = vld [vmem:[%s166 + $0x6c] sm:$0xf]
      %v202 = vld [vmem:[%s166 + $0x70] sm:$0xf]
      %v203 = vld [vmem:[%s166 + $0x74] sm:$0xf]
      %v204 = vld [vmem:[%s166 + $0x78] sm:$0xf]
      %v205 = vld [vmem:[%s166 + $0x7c] sm:$0xf]
      %v206 = vld [vmem:[%s166 + $0x80] sm:$0xf]
      %v207 = vld [vmem:[%s166 + $0x84] sm:$0xf]
      %v208 = vld [vmem:[%s166 + $0x88] sm:$0xf]
      %v209 = vld [vmem:[%s166 + $0x8c] sm:$0xf]
      %v210 = vld [vmem:[%s166 + $0x90] sm:$0xf]
      %v211 = vld [vmem:[%s166 + $0x94] sm:$0xf]
      %v212 = vld [vmem:[%s166 + $0x98] sm:$0xf]
      %v213 = vld [vmem:[%s166 + $0x9c] sm:$0xf]
      %v214 = vld [vmem:[%s166 + $0xa0] sm:$0xf]
      %v215 = vld [vmem:[%s166 + $0xa4] sm:$0xf]
      %v216 = vld [vmem:[%s166 + $0xa8] sm:$0xf]
      %v217 = vld [vmem:[%s166 + $0xac] sm:$0xf]
      %v218 = vld [vmem:[%s166 + $0xb0] sm:$0xf]
      %v219 = vld [vmem:[%s166 + $0xb4] sm:$0xf]
      %v220 = vld [vmem:[%s166 + $0xb8] sm:$0xf]
      %v221 = vld [vmem:[%s166 + $0xbc] sm:$0xf]
      %v222 = vld [vmem:[%s166 + $0xc0] sm:$0xf]
      %v223 = vld [vmem:[%s166 + $0xc4] sm:$0xf]
      %v224 = vld [vmem:[%s166 + $0xc8] sm:$0xf]
      %v225 = vld [vmem:[%s166 + $0xcc] sm:$0xf]
      %v226 = vld [vmem:[%s166 + $0xd0] sm:$0xf]
      %v227 = vld [vmem:[%s166 + $0xd4] sm:$0xf]
      %v228 = vld [vmem:[%s166 + $0xd8] sm:$0xf]
      %v229 = vld [vmem:[%s166 + $0xdc] sm:$0xf]
      %v230 = vld [vmem:[%s166 + $0xe0] sm:$0xf]
      %v231 = vld [vmem:[%s166 + $0xe4] sm:$0xf]
      %v232 = vld [vmem:[%s166 + $0xe8] sm:$0xf]
      %v233 = vld [vmem:[%s166 + $0xec] sm:$0xf]
      %v234 = vld [vmem:[%s166 + $0xf0] sm:$0xf]
      %v235 = vld [vmem:[%s166 + $0xf4] sm:$0xf]
      %v236 = vld [vmem:[%s166 + $0xf8] sm:$0xf]
      %v237 = vld [vmem:[%s166 + $0xfc] sm:$0xf]
      %v238 = vunpack.c.l.bf16 %v174
      %v239 = vunpack.c.l.bf16 %v175
      %v240 = vunpack.c.l.bf16 %v176
      %v241 = vunpack.c.l.bf16 %v177
      %v242 = vunpack.c.l.bf16 %v178
      %v243 = vunpack.c.l.bf16 %v179
      %v244 = vunpack.c.l.bf16 %v180
      %v245 = vunpack.c.l.bf16 %v181
      %v246 = vunpack.c.l.bf16 %v182
      %v247 = vunpack.c.l.bf16 %v183
      %v248 = vunpack.c.l.bf16 %v184
      %v249 = vunpack.c.l.bf16 %v185
      %v250 = vunpack.c.l.bf16 %v186
      %v251 = vunpack.c.l.bf16 %v187
      %v252 = vunpack.c.l.bf16 %v188
      %v253 = vunpack.c.l.bf16 %v189
      %v254 = vunpack.c.l.bf16 %v190
      %v255 = vunpack.c.l.bf16 %v191
      %v256 = vunpack.c.l.bf16 %v192
      %v257 = vunpack.c.l.bf16 %v193
      %v258 = vunpack.c.l.bf16 %v194
      %v259 = vunpack.c.l.bf16 %v195
      %v260 = vunpack.c.l.bf16 %v196
      %v261 = vunpack.c.l.bf16 %v197
      %v262 = vunpack.c.l.bf16 %v198
      %v263 = vunpack.c.l.bf16 %v199
      %v264 = vunpack.c.l.bf16 %v200
      %v265 = vunpack.c.l.bf16 %v201
      %v266 = vunpack.c.l.bf16 %v202
      %v267 = vunpack.c.l.bf16 %v203
      %v268 = vunpack.c.l.bf16 %v204
      %v269 = vunpack.c.l.bf16 %v205
      %v270 = vunpack.c.l.bf16 %v206
      %v271 = vunpack.c.l.bf16 %v207
      %v272 = vunpack.c.l.bf16 %v208
      %v273 = vunpack.c.l.bf16 %v209
      %v274 = vunpack.c.l.bf16 %v210
      %v275 = vunpack.c.l.bf16 %v211
      %v276 = vunpack.c.l.bf16 %v212
      %v277 = vunpack.c.l.bf16 %v213
      %v278 = vunpack.c.l.bf16 %v214
      %v279 = vunpack.c.l.bf16 %v215
      %v280 = vunpack.c.l.bf16 %v216
      %v281 = vunpack.c.l.bf16 %v217
      %v282 = vunpack.c.l.bf16 %v218
      %v283 = vunpack.c.l.bf16 %v219
      %v284 = vunpack.c.l.bf16 %v220
      %v285 = vunpack.c.l.bf16 %v221
      %v286 = vunpack.c.l.bf16 %v222
      %v287 = vunpack.c.l.bf16 %v223
      %v288 = vunpack.c.l.bf16 %v224
      %v289 = vunpack.c.l.bf16 %v225
      %v290 = vunpack.c.l.bf16 %v226
      %v291 = vunpack.c.l.bf16 %v227
      %v292 = vunpack.c.l.bf16 %v228
      %v293 = vunpack.c.l.bf16 %v229
      %v294 = vunpack.c.l.bf16 %v230
      %v295 = vunpack.c.l.bf16 %v231
      %v296 = vunpack.c.l.bf16 %v232
      %v297 = vunpack.c.l.bf16 %v233
      %v298 = vunpack.c.l.bf16 %v234
      %v299 = vunpack.c.l.bf16 %v235
      %v300 = vunpack.c.l.bf16 %v236
      %v301 = vunpack.c.l.bf16 %v237
      %v302 = vld [vmem:[%s1] sm:$0x1]
      %v304 = vlaneseq
      %v305 = vshrl.u32 %v304, 7
      %v306 = vsub.s32 0, %v305
      %v307 = vrot.slane %v302, %v306
      %v309 = vmul.f32 %v238, %v307
      %v310 = vmul.f32 %v239, %v307
      %v311 = vmul.f32 %v240, %v307
      %v312 = vmul.f32 %v241, %v307
      %v313 = vmul.f32 %v242, %v307
      %v314 = vmul.f32 %v243, %v307
      %v315 = vmul.f32 %v244, %v307
      %v316 = vmul.f32 %v245, %v307
      %v317 = vmul.f32 %v246, %v307
      %v318 = vmul.f32 %v247, %v307
      %v319 = vmul.f32 %v248, %v307
      %v320 = vmul.f32 %v249, %v307
      %v321 = vmul.f32 %v250, %v307
      %v322 = vmul.f32 %v251, %v307
      %v323 = vmul.f32 %v252, %v307
      %v324 = vmul.f32 %v253, %v307
      %v325 = vmul.f32 %v254, %v307
      %v326 = vmul.f32 %v255, %v307
      %v327 = vmul.f32 %v256, %v307
      %v328 = vmul.f32 %v257, %v307
      %v329 = vmul.f32 %v258, %v307
      %v330 = vmul.f32 %v259, %v307
      %v331 = vmul.f32 %v260, %v307
      %v332 = vmul.f32 %v261, %v307
      %v333 = vmul.f32 %v262, %v307
      %v334 = vmul.f32 %v263, %v307
      %v335 = vmul.f32 %v264, %v307
      %v336 = vmul.f32 %v265, %v307
      %v337 = vmul.f32 %v266, %v307
      %v338 = vmul.f32 %v267, %v307
      %v339 = vmul.f32 %v268, %v307
      %v340 = vmul.f32 %v269, %v307
      %v341 = vmul.f32 %v270, %v307
      %v342 = vmul.f32 %v271, %v307
      %v343 = vmul.f32 %v272, %v307
      %v344 = vmul.f32 %v273, %v307
      %v345 = vmul.f32 %v274, %v307
      %v346 = vmul.f32 %v275, %v307
      %v347 = vmul.f32 %v276, %v307
      %v348 = vmul.f32 %v277, %v307
      %v349 = vmul.f32 %v278, %v307
      %v350 = vmul.f32 %v279, %v307
      %v351 = vmul.f32 %v280, %v307
      %v352 = vmul.f32 %v281, %v307
      %v353 = vmul.f32 %v282, %v307
      %v354 = vmul.f32 %v283, %v307
      %v355 = vmul.f32 %v284, %v307
      %v356 = vmul.f32 %v285, %v307
      %v357 = vmul.f32 %v286, %v307
      %v358 = vmul.f32 %v287, %v307
      %v359 = vmul.f32 %v288, %v307
      %v360 = vmul.f32 %v289, %v307
      %v361 = vmul.f32 %v290, %v307
      %v362 = vmul.f32 %v291, %v307
      %v363 = vmul.f32 %v292, %v307
      %v364 = vmul.f32 %v293, %v307
      %v365 = vmul.f32 %v294, %v307
      %v366 = vmul.f32 %v295, %v307
      %v367 = vmul.f32 %v296, %v307
      %v368 = vmul.f32 %v297, %v307
      %v369 = vmul.f32 %v298, %v307
      %v370 = vmul.f32 %v299, %v307
      %v371 = vmul.f32 %v300, %v307
      %v372 = vmul.f32 %v301, %v307
      %v373 = vld [vmem:[%s2] sm:$0x1]
      %v375 = vlaneseq
      %v376 = vshrl.u32 %v375, 7
      %v377 = vsub.s32 0, %v376
      %v378 = vrot.slane %v373, %v377
      %v380 = vadd.f32 %v309, %v378
      %v381 = vadd.f32 %v310, %v378
      %v382 = vadd.f32 %v311, %v378
      %v383 = vadd.f32 %v312, %v378
      %v384 = vadd.f32 %v313, %v378
      %v385 = vadd.f32 %v314, %v378
      %v386 = vadd.f32 %v315, %v378
      %v387 = vadd.f32 %v316, %v378
      %v388 = vadd.f32 %v317, %v378
      %v389 = vadd.f32 %v318, %v378
      %v390 = vadd.f32 %v319, %v378
      %v391 = vadd.f32 %v320, %v378
      %v392 = vadd.f32 %v321, %v378
      %v393 = vadd.f32 %v322, %v378
      %v394 = vadd.f32 %v323, %v378
      %v395 = vadd.f32 %v324, %v378
      %v396 = vadd.f32 %v325, %v378
      %v397 = vadd.f32 %v326, %v378
      %v398 = vadd.f32 %v327, %v378
      %v399 = vadd.f32 %v328, %v378
      %v400 = vadd.f32 %v329, %v378
      %v401 = vadd.f32 %v330, %v378
      %v402 = vadd.f32 %v331, %v378
      %v403 = vadd.f32 %v332, %v378
      %v404 = vadd.f32 %v333, %v378
      %v405 = vadd.f32 %v334, %v378
      %v406 = vadd.f32 %v335, %v378
      %v407 = vadd.f32 %v336, %v378
      %v408 = vadd.f32 %v337, %v378
      %v409 = vadd.f32 %v338, %v378
      %v410 = vadd.f32 %v339, %v378
      %v411 = vadd.f32 %v340, %v378
      %v412 = vadd.f32 %v341, %v378
      %v413 = vadd.f32 %v342, %v378
      %v414 = vadd.f32 %v343, %v378
      %v415 = vadd.f32 %v344, %v378
      %v416 = vadd.f32 %v345, %v378
      %v417 = vadd.f32 %v346, %v378
      %v418 = vadd.f32 %v347, %v378
      %v419 = vadd.f32 %v348, %v378
      %v420 = vadd.f32 %v349, %v378
      %v421 = vadd.f32 %v350, %v378
      %v422 = vadd.f32 %v351, %v378
      %v423 = vadd.f32 %v352, %v378
      %v424 = vadd.f32 %v353, %v378
      %v425 = vadd.f32 %v354, %v378
      %v426 = vadd.f32 %v355, %v378
      %v427 = vadd.f32 %v356, %v378
      %v428 = vadd.f32 %v357, %v378
      %v429 = vadd.f32 %v358, %v378
      %v430 = vadd.f32 %v359, %v378
      %v431 = vadd.f32 %v360, %v378
      %v432 = vadd.f32 %v361, %v378
      %v433 = vadd.f32 %v362, %v378
      %v434 = vadd.f32 %v363, %v378
      %v435 = vadd.f32 %v364, %v378
      %v436 = vadd.f32 %v365, %v378
      %v437 = vadd.f32 %v366, %v378
      %v438 = vadd.f32 %v367, %v378
      %v439 = vadd.f32 %v368, %v378
      %v440 = vadd.f32 %v369, %v378
      %v441 = vadd.f32 %v370, %v378
      %v442 = vadd.f32 %v371, %v378
      %v443 = vadd.f32 %v372, %v378
      %v444 = vmax.f32 %v380, 0.0
      %v445 = vmax.f32 %v381, 0.0
      %v446 = vmax.f32 %v382, 0.0
      %v447 = vmax.f32 %v383, 0.0
      %v448 = vmax.f32 %v384, 0.0
      %v449 = vmax.f32 %v385, 0.0
      %v450 = vmax.f32 %v386, 0.0
      %v451 = vmax.f32 %v387, 0.0
      %v452 = vmax.f32 %v388, 0.0
      %v453 = vmax.f32 %v389, 0.0
      %v454 = vmax.f32 %v390, 0.0
      %v455 = vmax.f32 %v391, 0.0
      %v456 = vmax.f32 %v392, 0.0
      %v457 = vmax.f32 %v393, 0.0
      %v458 = vmax.f32 %v394, 0.0
      %v459 = vmax.f32 %v395, 0.0
      %v460 = vmax.f32 %v396, 0.0
      %v461 = vmax.f32 %v397, 0.0
      %v462 = vmax.f32 %v398, 0.0
      %v463 = vmax.f32 %v399, 0.0
      %v464 = vmax.f32 %v400, 0.0
      %v465 = vmax.f32 %v401, 0.0
      %v466 = vmax.f32 %v402, 0.0
      %v467 = vmax.f32 %v403, 0.0
      %v468 = vmax.f32 %v404, 0.0
      %v469 = vmax.f32 %v405, 0.0
      %v470 = vmax.f32 %v406, 0.0
      %v471 = vmax.f32 %v407, 0.0
      %v472 = vmax.f32 %v408, 0.0
      %v473 = vmax.f32 %v409, 0.0
      %v474 = vmax.f32 %v410, 0.0
      %v475 = vmax.f32 %v411, 0.0
      %v476 = vmax.f32 %v412, 0.0
      %v477 = vmax.f32 %v413, 0.0
      %v478 = vmax.f32 %v414, 0.0
      %v479 = vmax.f32 %v415, 0.0
      %v480 = vmax.f32 %v416, 0.0
      %v481 = vmax.f32 %v417, 0.0
      %v482 = vmax.f32 %v418, 0.0
      %v483 = vmax.f32 %v419, 0.0
      %v484 = vmax.f32 %v420, 0.0
      %v485 = vmax.f32 %v421, 0.0
      %v486 = vmax.f32 %v422, 0.0
      %v487 = vmax.f32 %v423, 0.0
      %v488 = vmax.f32 %v424, 0.0
      %v489 = vmax.f32 %v425, 0.0
      %v490 = vmax.f32 %v426, 0.0
      %v491 = vmax.f32 %v427, 0.0
      %v492 = vmax.f32 %v428, 0.0
      %v493 = vmax.f32 %v429, 0.0
      %v494 = vmax.f32 %v430, 0.0
      %v495 = vmax.f32 %v431, 0.0
      %v496 = vmax.f32 %v432, 0.0
      %v497 = vmax.f32 %v433, 0.0
      %v498 = vmax.f32 %v434, 0.0
      %v499 = vmax.f32 %v435, 0.0
      %v500 = vmax.f32 %v436, 0.0
      %v501 = vmax.f32 %v437, 0.0
      %v502 = vmax.f32 %v438, 0.0
      %v503 = vmax.f32 %v439, 0.0
      %v504 = vmax.f32 %v440, 0.0
      %v505 = vmax.f32 %v441, 0.0
      %v506 = vmax.f32 %v442, 0.0
      %v507 = vmax.f32 %v443, 0.0
      %508 = vst [vmem:[%s172] sm:$0xff] %v444
      %509 = vst [vmem:[%s172 + $0x8] sm:$0xff] %v445
      %510 = vst [vmem:[%s172 + $0x10] sm:$0xff] %v446
      %511 = vst [vmem:[%s172 + $0x18] sm:$0xff] %v447
      %512 = vst [vmem:[%s172 + $0x20] sm:$0xff] %v448
      %513 = vst [vmem:[%s172 + $0x28] sm:$0xff] %v449
      %514 = vst [vmem:[%s172 + $0x30] sm:$0xff] %v450
      %515 = vst [vmem:[%s172 + $0x38] sm:$0xff] %v451
      %516 = vst [vmem:[%s172 + $0x40] sm:$0xff] %v452
      %517 = vst [vmem:[%s172 + $0x48] sm:$0xff] %v453
      %518 = vst [vmem:[%s172 + $0x50] sm:$0xff] %v454
      %519 = vst [vmem:[%s172 + $0x58] sm:$0xff] %v455
      %520 = vst [vmem:[%s172 + $0x60] sm:$0xff] %v456
      %521 = vst [vmem:[%s172 + $0x68] sm:$0xff] %v457
      %522 = vst [vmem:[%s172 + $0x70] sm:$0xff] %v458
      %523 = vst [vmem:[%s172 + $0x78] sm:$0xff] %v459
      %524 = vst [vmem:[%s172 + $0x80] sm:$0xff] %v460
      %525 = vst [vmem:[%s172 + $0x88] sm:$0xff] %v461
      %526 = vst [vmem:[%s172 + $0x90] sm:$0xff] %v462
      %527 = vst [vmem:[%s172 + $0x98] sm:$0xff] %v463
      %528 = vst [vmem:[%s172 + $0xa0] sm:$0xff] %v464
      %529 = vst [vmem:[%s172 + $0xa8] sm:$0xff] %v465
      %530 = vst [vmem:[%s172 + $0xb0] sm:$0xff] %v466
      %531 = vst [vmem:[%s172 + $0xb8] sm:$0xff] %v467
      %532 = vst [vmem:[%s172 + $0xc0] sm:$0xff] %v468
      %533 = vst [vmem:[%s172 + $0xc8] sm:$0xff] %v469
      %534 = vst [vmem:[%s172 + $0xd0] sm:$0xff] %v470
      %535 = vst [vmem:[%s172 + $0xd8] sm:$0xff] %v471
      %536 = vst [vmem:[%s172 + $0xe0] sm:$0xff] %v472
      %537 = vst [vmem:[%s172 + $0xe8] sm:$0xff] %v473
      %538 = vst [vmem:[%s172 + $0xf0] sm:$0xff] %v474
      %539 = vst [vmem:[%s172 + $0xf8] sm:$0xff] %v475
      %540 = vst [vmem:[%s172 + $0x100] sm:$0xff] %v476
      %541 = vst [vmem:[%s172 + $0x108] sm:$0xff] %v477
      %542 = vst [vmem:[%s172 + $0x110] sm:$0xff] %v478
      %543 = vst [vmem:[%s172 + $0x118] sm:$0xff] %v479
      %544 = vst [vmem:[%s172 + $0x120] sm:$0xff] %v480
      %545 = vst [vmem:[%s172 + $0x128] sm:$0xff] %v481
      %546 = vst [vmem:[%s172 + $0x130] sm:$0xff] %v482
      %547 = vst [vmem:[%s172 + $0x138] sm:$0xff] %v483
      %548 = vst [vmem:[%s172 + $0x140] sm:$0xff] %v484
      %549 = vst [vmem:[%s172 + $0x148] sm:$0xff] %v485
      %550 = vst [vmem:[%s172 + $0x150] sm:$0xff] %v486
      %551 = vst [vmem:[%s172 + $0x158] sm:$0xff] %v487
      %552 = vst [vmem:[%s172 + $0x160] sm:$0xff] %v488
      %553 = vst [vmem:[%s172 + $0x168] sm:$0xff] %v489
      %554 = vst [vmem:[%s172 + $0x170] sm:$0xff] %v490
      %555 = vst [vmem:[%s172 + $0x178] sm:$0xff] %v491
      %556 = vst [vmem:[%s172 + $0x180] sm:$0xff] %v492
      %557 = vst [vmem:[%s172 + $0x188] sm:$0xff] %v493
      %558 = vst [vmem:[%s172 + $0x190] sm:$0xff] %v494
      %559 = vst [vmem:[%s172 + $0x198] sm:$0xff] %v495
      %560 = vst [vmem:[%s172 + $0x1a0] sm:$0xff] %v496
      %561 = vst [vmem:[%s172 + $0x1a8] sm:$0xff] %v497
      %562 = vst [vmem:[%s172 + $0x1b0] sm:$0xff] %v498
      %563 = vst [vmem:[%s172 + $0x1b8] sm:$0xff] %v499
      %564 = vst [vmem:[%s172 + $0x1c0] sm:$0xff] %v500
      %565 = vst [vmem:[%s172 + $0x1c8] sm:$0xff] %v501
      %566 = vst [vmem:[%s172 + $0x1d0] sm:$0xff] %v502
      %567 = vst [vmem:[%s172 + $0x1d8] sm:$0xff] %v503
      %568 = vst [vmem:[%s172 + $0x1e0] sm:$0xff] %v504
      %569 = vst [vmem:[%s172 + $0x1e8] sm:$0xff] %v505
      %570 = vst [vmem:[%s172 + $0x1f0] sm:$0xff] %v506
      %571 = vst [vmem:[%s172 + $0x1f8] sm:$0xff] %v507
      %s572 = smul.u32 64, %s14
      %p573 = scmp.lt.s32.totalorder %s572, 255
      %s574 = scalar_select %p573, %s572, 255
      %s575 = smul.addr %s574, 8
      %s576 = scalar_lea.vmem %s3, %s575
      // Predicated region
      $region33: #{upconv_block.3} parent=31 // pred_check
        %p577 = pneg %p100
      $region34: #{upconv_block.3} parent=31 // pred_check_branch
        %579 = sbr.rel (%p577) target = $region36
      $region35: #{upconv_block.3} parent=31 // pred_region
        %s580 = smul.u32 64, %s14
      $region36: #{upconv_block.3} parent=31 // pred_fallthru
        _
    $region32: #{upconv_block.3} parent=5 // pred_fallthru
      _
    %p581 = scmp.le.s32.totalorder 2, %s9
    // Predicated region
    $region37: #{upconv_block.3} parent=5 // pred_check
      %p582 = pneg %p581
    $region38: #{upconv_block.3} parent=5 // pred_check_branch
      %584 = sbr.rel (%p582) target = $region40
    $region39: #{upconv_block.3} parent=5 // pred_region
      %s585 = ssub.s32 %s9, 2
      // Predicated region
      $region41: #{upconv_block.3} parent=39 // pred_check
        %p586 = pneg %p106
      $region42: #{upconv_block.3} parent=39 // pred_check_branch
        %588 = sbr.rel (%p586) target = $region44
      $region43: #{upconv_block.3} parent=39 // pred_region
        %s589 = smul.u32 64, %s15
        %p590 = scmp.lt.s32.totalorder %s589, 255
        %s591 = scalar_select %p590, %s589, 255
        %s592 = smul.addr %s591, 8
        %s593 = scalar_lea.vmem %s3, %s592
      $region44: #{upconv_block.3} parent=39 // pred_fallthru
        _
    $region40: #{upconv_block.3} parent=5 // pred_fallthru
      _
  $region6: #{upconv_block.3} parent=0 // loop_footer
    %s13 = sadd.s32 1, %s9
  $region7: #{upconv_block.3} parent=0 // loop_footer_branch
    %8 = sbr.rel target = $region3
  $region8: #{upconv_block.3} parent=0 // loop_exit
    _

</llo_original>
